<compile_context>
chip_gen: v7x
topology: tpu7x:2x2x1
jax: 0.10.0
libtpu: 0.0.40
codegen_flags: <defaults>
</compile_context>

<pallas_src>
import math
import functools

import jax
import jax.numpy as jnp
from jax import lax
from jax.experimental import pallas as pl
from jax.experimental.pallas import tpu as pltpu

TWO_PI = 2.0 * math.pi


def _round_up(x, m):
    return ((x + m - 1) // m) * m


def _cdiv(a, b):
    return (a + b - 1) // b


def _pick_tile(n, cap):
    """Largest divisor of n that is a multiple of 16 (fallback 8) and <= cap."""
    cap = int(min(cap, n))
    best8 = None
    for t in range(cap, 7, -1):
        if n % t == 0:
            if t % 16 == 0:
                return t
            if best8 is None and t % 8 == 0:
                best8 = t
    return best8 if best8 is not None else n


# --------------------------------------------------------------------------------------
# Kernel 1: PLR (lite) embeddings + encoder Linear (+ per-row squared norms)
# --------------------------------------------------------------------------------------
def _plr_encoder_kernel(x_num_ref, x_cat_ref, freq_ref, wc_ref, ws_ref, plr_b_ref,
                        enc_wnum_ref, enc_wcat_ref, enc_b_ref,
                        out_ref, sqn_ref, emb_ref):
    n_feat = freq_ref.shape[0]        # static
    d_emb = plr_b_ref.shape[-1]       # static
    bias = plr_b_ref[...]

    # Per-feature PLR(lite) projection (K, E are small).  Results are packed into the flat
    # bf16 VMEM scratch emb_ref[:, f*E:(f+1)*E] so the encoder below runs as ONE bf16 MXU
    # matmul with contraction F*E.  cos/sin weights are pre-split in the wrapper, so there
    # is no lane-axis concatenate.
    for f in range(n_feat):                                               # static unroll
        t = TWO_PI * x_num_ref[:, f:f + 1] * freq_ref[f:f + 1, :]         # (TB, K)
        emb = jnp.dot(jnp.cos(t), wc_ref[...], preferred_element_type=jnp.float32)
        emb = emb + jnp.dot(jnp.sin(t), ws_ref[...], preferred_element_type=jnp.float32)
        emb_ref[:, f * d_emb:(f + 1) * d_emb] = (
            jnp.maximum(emb + bias, 0.0).astype(emb_ref.dtype))

    # Encoder Linear: bf16 x bf16 MXU matmuls with f32 accumulation (weights pre-cast in
    # the wrapper), bias added in f32.
    enc = jnp.dot(emb_ref[...], enc_wnum_ref[...], preferred_element_type=jnp.float32)
    enc = enc + jnp.dot(x_cat_ref[...], enc_wcat_ref[...], preferred_element_type=jnp.float32)
    enc = enc + enc_b_ref[...]

    out_q = enc.astype(out_ref.dtype)
    out_ref[...] = out_q
    encq = out_q.astype(jnp.float32)
    sqn_ref[...] = jnp.sum(encq * encq, axis=-1, keepdims=True)   # norms of the ROUNDED values


def plr_encode(x_num, x_cat, params, *, out_dtype=jnp.bfloat16, out_rows=None,
               tile_cap=1024):
    """Returns (encoded [R_out, D] in out_dtype, squared norms [R_out, 1] f32).

    Outputs are row-padded to `out_rows` (rows >= R encode zero-padded inputs); callers
    keep/consume the padded layout so no big slice-copy of the encodings happens.
    """
    R, F = x_num.shape
    C = x_cat.shape[1]
    K = params["freq"].shape[1]
    E = params["plr_b"].shape[-1]
    D = params["enc_b"].shape[-1]

    R_out = _round_up(R, 16) if out_rows is None else int(out_rows)
    R_out = max(R_out, R)
    tb = _pick_tile(R_out, tile_cap)

    if R_out != R:
        x_num = jnp.pad(x_num, ((0, R_out - R), (0, 0)))
        x_cat = jnp.pad(x_cat, ((0, R_out - R), (0, 0)))

    x_num = x_num.astype(jnp.float32)
    x_cat = x_cat.astype(jnp.bfloat16)
    wnum = params["enc_wnum"].astype(jnp.bfloat16)
    wcat = params["enc_wcat"].astype(jnp.bfloat16)

    enc, sqn = pl.pallas_call(
        _plr_encoder_kernel,
        out_shape=(jax.ShapeDtypeStruct((R_out, D), out_dtype),
                   jax.ShapeDtypeStruct((R_out, 1), jnp.float32)),
        grid_spec=pltpu.PrefetchScalarGridSpec(
            num_scalar_prefetch=0,
            grid=(R_out // tb,),
            in_specs=[
                pl.BlockSpec((tb, F), lambda i: (i, 0)),
                pl.BlockSpec((tb, C), lambda i: (i, 0)),
                pl.BlockSpec((F, K), lambda i: (0, 0)),          # weights: full arrays,
                pl.BlockSpec((K, E), lambda i: (0, 0)),          # resident across the grid
                pl.BlockSpec((K, E), lambda i: (0, 0)),
                pl.BlockSpec((1, E), lambda i: (0, 0)),
                pl.BlockSpec((F * E, D), lambda i: (0, 0)),
                pl.BlockSpec((C, D), lambda i: (0, 0)),
                pl.BlockSpec((1, D), lambda i: (0, 0)),
            ],
            out_specs=(pl.BlockSpec((tb, D), lambda i: (i, 0)),
                       pl.BlockSpec((tb, 1), lambda i: (i, 0))),
            scratch_shapes=[pltpu.VMEM((tb, F * E), jnp.bfloat16)],
        ),
        compiler_params=pltpu.CompilerParams(
            dimension_semantics=("parallel",),
            vmem_limit_bytes=48 * 1024 * 1024),
    )(x_num, x_cat, params["freq"], params["plr_w_cos"], params["plr_w_sin"],
      params["plr_b"], wnum, wcat, params["enc_b"])
    return enc, sqn


# --------------------------------------------------------------------------------------
# Kernel 2: NCA retrieval (cdist -> exp(-d) -> per-chunk logsumexp + weighted label sum)
# --------------------------------------------------------------------------------------
def _nca_kernel(x_ref, xsq_ref, cand_ref, csq_ref, y_ref,
                logits_out, lse_out, logits_acc, lse_acc, *,
                temperature, n_cand, chunk, num_classes, qtile, ncs):
    c = pl.program_id(2)
    c_glob = pl.program_id(0) * ncs + c

    @pl.when(c == 0)
    def _init():
        logits_acc[...] = jnp.zeros_like(logits_acc)
        lse_acc[...] = jnp.zeros_like(lse_acc)

    cx = cand_ref[...]                              # (chunk_pad, D) bf16
    c2 = csq_ref[...]                               # (1, chunk_pad) f32 (pad lanes = 1e30)
    chunk_pad = cx.shape[0]
    inv_t = 1.0 / temperature

    # Valid candidate count in this chunk (reference boundaries at multiples of `chunk`);
    # only the logsumexp needs an explicit lane mask (padded lanes self-mask to e == 0 for
    # the logits matmul via their huge squared norm).
    valid = jnp.minimum(chunk, n_cand - c_glob * chunk)
    col = lax.broadcasted_iota(jnp.int32, (1, chunk_pad), 1)
    lse_mask = (col < valid).astype(jnp.float32)

    # exp(-d) @ one_hot(y): the one-hot is built in-kernel from int32 labels so only N
    # int32 values stream through HBM (not a dense N x d_out f32 one-hot).
    if num_classes > 1:
        cy = y_ref[...]                                                    # (1, chunk_pad) i32
        cls = lax.broadcasted_iota(jnp.int32, (num_classes, chunk_pad), 0)
        rows = (cls == cy).astype(jnp.bfloat16)                            # (d_out, chunk_pad)
        mm_dtype = jnp.bfloat16
    else:
        rows = y_ref[...]                                                  # (1, chunk_pad) f32
        mm_dtype = jnp.float32

    n_sub = x_ref.shape[0] // qtile   # static

    @pl.loop(0, n_sub)
    def _sub(si):
        r = pl.ds(pl.multiple_of(si * qtile, qtile), qtile)
        x = x_ref[r, :]                                          # (qtile, D)  bf16 query rows
        x2 = xsq_ref[r, :]                                       # (qtile, 1)  f32 ||x||^2 (bf16-rounded)
        # torch.cdist(p=2): ||x||^2 + ||c||^2 - 2 x.c (clamped), then sqrt.  bf16 MXU dot,
        # f32 accumulation.
        xc = lax.dot_general(x, cx, (((1,), (1,)), ((), ())),
                             preferred_element_type=jnp.float32)  # (qtile, chunk_pad)
        sq = jnp.maximum(x2 + c2 - 2.0 * xc, 0.0)
        e = jnp.exp(-(jnp.sqrt(sq) * inv_t))                      # pad lanes -> exactly 0
        # Reference: logsumexp over the chunk of exp(-d).  e <= 1, so no max-shift needed.
        lse_acc[r, :] += jnp.log(
            jnp.sum(jnp.exp(e) * lse_mask, axis=-1, keepdims=True))
        logits_acc[r, :] += lax.dot_general(e.astype(mm_dtype), rows,
                                            (((1,), (1,)), ((), ())),
                                            preferred_element_type=jnp.float32)

    @pl.when(c == ncs - 1)
    def _fin():
        logits_out[...] = logits_acc[...]
        lse_out[...] = lse_acc[...]


def nca_retrieval(x_enc, x_sqn, cand_enc, csq3, y3, *, n_cand, chunk, chunk_pad,
                  n_chunks, num_classes, temperature, qgroup, qtile):
    """x_enc (B_pad, D) bf16, x_sqn (B_pad, 1) f32, cand_enc (n_chunks*chunk_pad, D) bf16,
    csq3/y3 (n_chunks, 1, chunk_pad).  Returns log(sum_chunks e @ y) - sum_chunks lse."""
    B_pad, D = x_enc.shape
    d_out = max(int(num_classes), 1)
    n_qgroups = B_pad // qgroup
    # Size-2 "parallel" split over candidate chunks keeps both v7x TensorCores busy even
    # with a single query group; (near-)free on 1-TC chips.  Even split only (no phantom
    # chunks -> no in-kernel guards).
    n_splits = 2 if (n_chunks >= 2 and n_chunks % 2 == 0) else 1
    ncs = n_chunks // n_splits

    kernel = functools.partial(
        _nca_kernel, temperature=float(temperature), n_cand=n_cand, chunk=chunk,
        num_classes=d_out, qtile=qtile, ncs=ncs)

    partial_logits, partial_lse = pl.pallas_call(
        kernel,
        out_shape=(jax.ShapeDtypeStruct((n_splits, B_pad, d_out), jnp.float32),
                   jax.ShapeDtypeStruct((n_splits, B_pad, 1), jnp.float32)),
        grid_spec=pltpu.PrefetchScalarGridSpec(
            num_scalar_prefetch=0,
            grid=(n_splits, n_qgroups, ncs),       # (chunk split, query groups, chunk reduction)
            in_specs=[
                pl.BlockSpec((qgroup, D), lambda s, g, c: (g, 0)),             # queries: resident
                pl.BlockSpec((qgroup, 1), lambda s, g, c: (g, 0)),             # across the c axis
                pl.BlockSpec((chunk_pad, D), lambda s, g, c: (s * ncs + c, 0)),
                pl.BlockSpec((None, 1, chunk_pad), lambda s, g, c: (s * ncs + c, 0, 0)),
                pl.BlockSpec((None, 1, chunk_pad), lambda s, g, c: (s * ncs + c, 0, 0)),
            ],
            out_specs=(pl.BlockSpec((None, qgroup, d_out), lambda s, g, c: (s, g, 0)),
                       pl.BlockSpec((None, qgroup, 1), lambda s, g, c: (s, g, 0))),
            scratch_shapes=[
                pltpu.VMEM((qgroup, d_out), jnp.float32),
                pltpu.VMEM((qgroup, 1), jnp.float32),
            ],
        ),
        compiler_params=pltpu.CompilerParams(
            dimension_semantics=("parallel", "parallel", "arbitrary"),
            vmem_limit_bytes=48 * 1024 * 1024),   # safe on v7x (64 MiB) and v5e/v6e (128 MiB)
    )(x_enc, x_sqn, cand_enc, csq3, y3)

    logits = jnp.sum(partial_logits, axis=0)       # (B_pad, d_out)
    lse = jnp.sum(partial_lse, axis=0)             # (B_pad, 1)
    # torch: log(sum exp(-d) @ y) - sum_chunks logsumexp(exp(-d))  (log(0) -> -inf, as torch)
    return jnp.log(logits) - lse


# --------------------------------------------------------------------------------------
# ModernNCA forward (glue in plain JAX)
# --------------------------------------------------------------------------------------
def _to_chunk_layout(a, n, n_chunks, chunk, chunk_pad):
    """(n, W) -> (n_chunks * chunk_pad, W): reference 5000-row chunks, each padded to
    chunk_pad rows (only tiny raw-feature / label arrays go through this)."""
    w = a.shape[1]
    a = jnp.pad(a, ((0, n_chunks * chunk - n), (0, 0)))
    a = a.reshape(n_chunks, chunk, w)
    a = jnp.pad(a, ((0, 0), (0, chunk_pad - chunk), (0, 0)))
    return a.reshape(n_chunks * chunk_pad, w)


def modern_nca_forward(params, x_num, x_cat, candidate_x_num, candidate_x_cat,
                       candidate_y, *, d_out, temperature=1.0, cand_chunk=5000,
                       query_tile=256, query_group_tiles=4):
    B = x_num.shape[0]
    N = candidate_x_num.shape[0]
    d_cls = max(int(d_out), 1)

    # --- candidate chunk layout (reference iterates candidates in steps of cand_chunk) ---
    chunk = min(int(cand_chunk), N)
    n_chunks = _cdiv(N, chunk)
    chunk_pad = _round_up(chunk, 128)              # lane-friendly + gives nice encoder tiles
    n_layout = n_chunks * chunk_pad

    # --- query tiling: a whole group stays VMEM-resident across the candidate stream ---
    b16 = _round_up(B, 16)
    if b16 <= query_tile:
        qtile = qgroup = b16
    else:
        qtile = int(query_tile)
        qgroup = min(query_group_tiles * qtile, _round_up(b16, qtile))
    B_pad = _round_up(B, qgroup)

    # --- encode queries (bf16 encodings + squared norms reused by the retrieval kernel) ---
    x_enc, x_sqn = plr_encode(x_num, x_cat, params, out_dtype=jnp.bfloat16, out_rows=B_pad)

    # --- encode candidates directly into the chunk-padded layout (only the small raw
    #     feature block is repacked, never the (N, D) encodings) ---
    c_num = _to_chunk_layout(candidate_x_num.astype(jnp.float32), N, n_chunks, chunk, chunk_pad)
    c_cat = _to_chunk_layout(candidate_x_cat.astype(jnp.float32), N, n_chunks, chunk, chunk_pad)
    cand_enc, cand_sqn = plr_encode(c_num, c_cat, params, out_dtype=jnp.bfloat16,
                                    out_rows=n_layout)

    # Candidate squared norms with self-masking padding: pad lanes get a huge value so the
    # retrieval kernel's exp(-dist) underflows to exactly 0 there (no per-chunk where pass
    # needed for the logits matmul).
    row = jnp.arange(n_layout, dtype=jnp.int32)
    within = row % chunk_pad
    orig = (row // chunk_pad) * chunk + within
    is_valid = (within < chunk) & (orig < N)
    csq = jnp.where(is_valid[:, None], cand_sqn, jnp.float32(1e30))
    csq3 = csq.reshape(n_chunks, chunk_pad)[:, None, :]           # (n_chunks, 1, chunk_pad)

    if d_cls > 1:
        y2 = candidate_y.astype(jnp.int32).reshape(N, 1)
    else:
        y2 = candidate_y.astype(jnp.float32).reshape(N, 1)
    y3 = _to_chunk_layout(y2, N, n_chunks, chunk, chunk_pad)
    y3 = y3.reshape(n_chunks, chunk_pad)[:, None, :]              # (n_chunks, 1, chunk_pad)

    out = nca_retrieval(x_enc, x_sqn, cand_enc, csq3, y3,
                        n_cand=N, chunk=chunk, chunk_pad=chunk_pad, n_chunks=n_chunks,
                        num_classes=d_cls, temperature=temperature,
                        qgroup=qgroup, qtile=qtile)
    return out[:B]


# --------------------------------------------------------------------------------------
# Deterministic parameter initialisation (matches module shapes; synthetic values)
# --------------------------------------------------------------------------------------
def init_params(key, *, d_in_num, d_in_cat, dim, n_frequencies,
                frequency_scale, d_embedding):
    F, K, E, C, D = d_in_num, n_frequencies, d_embedding, d_in_cat, dim
    ks = jax.random.split(key, 5)

    freq = frequency_scale * jax.random.normal(ks[0], (F, K), jnp.float32)

    b1 = 1.0 / math.sqrt(2 * K)   # nn.Linear default bound
    plr_w = jax.random.uniform(ks[1], (2 * K, E), jnp.float32, -b1, b1)
    plr_b = jax.random.uniform(ks[2], (1, E), jnp.float32, -b1, b1)

    d_in_total = F * E + C
    b2 = 1.0 / math.sqrt(d_in_total)
    enc_w = jax.random.uniform(ks[3], (d_in_total, D), jnp.float32, -b2, b2)
    enc_b = jax.random.uniform(ks[4], (1, D), jnp.float32, -b2, b2)

    return dict(
        freq=freq,
        plr_w_cos=plr_w[:K],                 # torch: cat([cos, sin]) @ linear.weight.T
        plr_w_sin=plr_w[K:],
        plr_b=plr_b,
        enc_wnum=enc_w[:F * E],              # row index f*E+e == flatten(1) order
        enc_wcat=enc_w[F * E:],
        enc_b=enc_b,
    )


if __name__ == "__main__":
    key = jax.random.PRNGKey(0)
    B, N = 8, 16                      # query batch, candidate rows
    F, K, E, C = 4, 8, 16, 4          # d_in_num, n_frequencies, d_embedding, d_in_cat
    D, d_out = 32, 3                  # encoder dim, number of classes

    kp, k1, k2, k3, k4 = jax.random.split(key, 5)
    params = init_params(kp, d_in_num=F, d_in_cat=C, dim=D,
                         n_frequencies=K, frequency_scale=0.1, d_embedding=E)

    x_num = jax.random.normal(k1, (B, F), jnp.float32)
    x_cat = jax.random.normal(k2, (B, C), jnp.float32)
    candidate_x_num = jax.random.normal(k3, (N, F), jnp.float32)
    candidate_x_cat = jax.random.normal(k4, (N, C), jnp.float32)
    candidate_y = jnp.arange(N, dtype=jnp.int32) % d_out

    out = modern_nca_forward(params, x_num, x_cat,
                             candidate_x_num, candidate_x_cat, candidate_y,
                             d_out=d_out, temperature=1.0)
    jax.block_until_ready(out)
    assert out.shape == (B, d_out) and out.dtype == jnp.float32
    print("KERNEL_OK")
</pallas_src>

<mosaic_0001>
module attributes {stable_mosaic.version = 11 : i64} {
  func.func @_plr_encoder_kernel(%arg0: i32, %arg1: memref<16x4xf32, #tpu.memory_space<vmem>>, %arg2: memref<16x4xbf16, #tpu.memory_space<vmem>>, %arg3: memref<4x8xf32, #tpu.memory_space<vmem>>, %arg4: memref<8x16xf32, #tpu.memory_space<vmem>>, %arg5: memref<8x16xf32, #tpu.memory_space<vmem>>, %arg6: memref<1x16xf32, #tpu.memory_space<vmem>>, %arg7: memref<64x32xbf16, #tpu.memory_space<vmem>>, %arg8: memref<4x32xbf16, #tpu.memory_space<vmem>>, %arg9: memref<1x32xf32, #tpu.memory_space<vmem>>, %arg10: memref<16x32xbf16, #tpu.memory_space<vmem>>, %arg11: memref<16x1xf32, #tpu.memory_space<vmem>>, %arg12: memref<16x64xbf16, #tpu.memory_space<vmem>>) attributes {dimension_semantics = [#tpu.dimension_semantics<parallel>], iteration_bounds = array<i64: 1>, scalar_prefetch = 0 : i64, scratch_operands = 1 : i64, tpu.core_type = #tpu.core_type<tc>, window_params = [{transform_indices = @transform_0, window_bounds = array<i64: 16, 4>}, {transform_indices = @transform_1, window_bounds = array<i64: 16, 4>}, {pipeline_mode = #tpu.pipeline_mode<synchronous>, transform_indices = @transform_2, window_bounds = array<i64: 4, 8>}, {pipeline_mode = #tpu.pipeline_mode<synchronous>, transform_indices = @transform_3, window_bounds = array<i64: 8, 16>}, {pipeline_mode = #tpu.pipeline_mode<synchronous>, transform_indices = @transform_4, window_bounds = array<i64: 8, 16>}, {pipeline_mode = #tpu.pipeline_mode<synchronous>, transform_indices = @transform_5, window_bounds = array<i64: 1, 16>}, {pipeline_mode = #tpu.pipeline_mode<synchronous>, transform_indices = @transform_6, window_bounds = array<i64: 64, 32>}, {pipeline_mode = #tpu.pipeline_mode<synchronous>, transform_indices = @transform_7, window_bounds = array<i64: 4, 32>}, {pipeline_mode = #tpu.pipeline_mode<synchronous>, transform_indices = @transform_8, window_bounds = array<i64: 1, 32>}, {transform_indices = @transform_9, window_bounds = array<i64: 16, 32>}, {transform_indices = @transform_10, window_bounds = array<i64: 16, 1>}]} {
    %c0 = arith.constant 0 : index
    %c0_0 = arith.constant 0 : index
    %0 = vector.load %arg6[%c0, %c0_0] : memref<1x16xf32, #tpu.memory_space<vmem>>, vector<1x16xf32>
    %c0_1 = arith.constant 0 : index
    %c0_2 = arith.constant 0 : index
    %1 = vector.load %arg1[%c0_1, %c0_2] : memref<16x4xf32, #tpu.memory_space<vmem>>, vector<16x1xf32>
    %cst = arith.constant 6.28318548 : f32
    %2 = vector.broadcast %cst : f32 to vector<16x1xf32>
    %3 = arith.mulf %2, %1 : vector<16x1xf32>
    %c0_3 = arith.constant 0 : index
    %c0_4 = arith.constant 0 : index
    %4 = vector.load %arg3[%c0_3, %c0_4] : memref<4x8xf32, #tpu.memory_space<vmem>>, vector<1x8xf32>
    %5 = vector.broadcast %3 : vector<16x1xf32> to vector<16x8xf32>
    %6 = vector.broadcast %4 : vector<1x8xf32> to vector<16x8xf32>
    %7 = arith.mulf %5, %6 : vector<16x8xf32>
    %8 = math.cos %7 : vector<16x8xf32>
    %c0_5 = arith.constant 0 : index
    %c0_6 = arith.constant 0 : index
    %9 = vector.load %arg4[%c0_5, %c0_6] : memref<8x16xf32, #tpu.memory_space<vmem>>, vector<8x16xf32>
    %cst_7 = arith.constant dense<0.000000e+00> : vector<16x16xf32>
    %10 = tpu.matmul %8, %9, %cst_7 {dimension_numbers = #tpu.dot_dimension_numbers<[1], [0], [0], [1], [0, 0, 1, 1], [], []>} : vector<16x8xf32>, vector<8x16xf32>, vector<16x16xf32> -> vector<16x16xf32>
    %11 = math.sin %7 : vector<16x8xf32>
    %c0_8 = arith.constant 0 : index
    %c0_9 = arith.constant 0 : index
    %12 = vector.load %arg5[%c0_8, %c0_9] : memref<8x16xf32, #tpu.memory_space<vmem>>, vector<8x16xf32>
    %cst_10 = arith.constant dense<0.000000e+00> : vector<16x16xf32>
    %13 = tpu.matmul %11, %12, %cst_10 {dimension_numbers = #tpu.dot_dimension_numbers<[1], [0], [0], [1], [0, 0, 1, 1], [], []>} : vector<16x8xf32>, vector<8x16xf32>, vector<16x16xf32> -> vector<16x16xf32>
    %14 = arith.addf %10, %13 : vector<16x16xf32>
    %15 = vector.broadcast %0 : vector<1x16xf32> to vector<16x16xf32>
    %16 = arith.addf %14, %15 : vector<16x16xf32>
    %cst_11 = arith.constant 0.000000e+00 : f32
    %17 = vector.broadcast %cst_11 : f32 to vector<16x16xf32>
    %18 = arith.maximumf %16, %17 : vector<16x16xf32>
    %19 = arith.truncf %18 : vector<16x16xf32> to vector<16x16xbf16>
    %c0_12 = arith.constant 0 : index
    %c0_13 = arith.constant 0 : index
    %20 = vector.load %arg12[%c0_12, %c0_13] : memref<16x64xbf16, #tpu.memory_space<vmem>>, vector<16x16xbf16>
    tpu.vector_store %arg12[%c0_12, %c0_13], %19 {strides = array<i32>} : memref<16x64xbf16, #tpu.memory_space<vmem>>, vector<16x16xbf16>,
    %c0_14 = arith.constant 0 : index
    %c1 = arith.constant 1 : index
    %21 = vector.load %arg1[%c0_14, %c1] : memref<16x4xf32, #tpu.memory_space<vmem>>, vector<16x1xf32>
    %cst_15 = arith.constant 6.28318548 : f32
    %22 = vector.broadcast %cst_15 : f32 to vector<16x1xf32>
    %23 = arith.mulf %22, %21 : vector<16x1xf32>
    %c1_16 = arith.constant 1 : index
    %c0_17 = arith.constant 0 : index
    %24 = vector.load %arg3[%c1_16, %c0_17] : memref<4x8xf32, #tpu.memory_space<vmem>>, vector<1x8xf32>
    %25 = vector.broadcast %23 : vector<16x1xf32> to vector<16x8xf32>
    %26 = vector.broadcast %24 : vector<1x8xf32> to vector<16x8xf32>
    %27 = arith.mulf %25, %26 : vector<16x8xf32>
    %28 = math.cos %27 : vector<16x8xf32>
    %c0_18 = arith.constant 0 : index
    %c0_19 = arith.constant 0 : index
    %29 = vector.load %arg4[%c0_18, %c0_19] : memref<8x16xf32, #tpu.memory_space<vmem>>, vector<8x16xf32>
    %cst_20 = arith.constant dense<0.000000e+00> : vector<16x16xf32>
    %30 = tpu.matmul %28, %29, %cst_20 {dimension_numbers = #tpu.dot_dimension_numbers<[1], [0], [0], [1], [0, 0, 1, 1], [], []>} : vector<16x8xf32>, vector<8x16xf32>, vector<16x16xf32> -> vector<16x16xf32>
    %31 = math.sin %27 : vector<16x8xf32>
    %c0_21 = arith.constant 0 : index
    %c0_22 = arith.constant 0 : index
    %32 = vector.load %arg5[%c0_21, %c0_22] : memref<8x16xf32, #tpu.memory_space<vmem>>, vector<8x16xf32>
    %cst_23 = arith.constant dense<0.000000e+00> : vector<16x16xf32>
    %33 = tpu.matmul %31, %32, %cst_23 {dimension_numbers = #tpu.dot_dimension_numbers<[1], [0], [0], [1], [0, 0, 1, 1], [], []>} : vector<16x8xf32>, vector<8x16xf32>, vector<16x16xf32> -> vector<16x16xf32>
    %34 = arith.addf %30, %33 : vector<16x16xf32>
    %35 = vector.broadcast %0 : vector<1x16xf32> to vector<16x16xf32>
    %36 = arith.addf %34, %35 : vector<16x16xf32>
    %cst_24 = arith.constant 0.000000e+00 : f32
    %37 = vector.broadcast %cst_24 : f32 to vector<16x16xf32>
    %38 = arith.maximumf %36, %37 : vector<16x16xf32>
    %39 = arith.truncf %38 : vector<16x16xf32> to vector<16x16xbf16>
    %c0_25 = arith.constant 0 : index
    %c16 = arith.constant 16 : index
    %40 = vector.load %arg12[%c0_25, %c16] : memref<16x64xbf16, #tpu.memory_space<vmem>>, vector<16x16xbf16>
    tpu.vector_store %arg12[%c0_25, %c16], %39 {strides = array<i32>} : memref<16x64xbf16, #tpu.memory_space<vmem>>, vector<16x16xbf16>,
    %c0_26 = arith.constant 0 : index
    %c2 = arith.constant 2 : index
    %41 = vector.load %arg1[%c0_26, %c2] : memref<16x4xf32, #tpu.memory_space<vmem>>, vector<16x1xf32>
    %cst_27 = arith.constant 6.28318548 : f32
    %42 = vector.broadcast %cst_27 : f32 to vector<16x1xf32>
    %43 = arith.mulf %42, %41 : vector<16x1xf32>
    %c2_28 = arith.constant 2 : index
    %c0_29 = arith.constant 0 : index
    %44 = vector.load %arg3[%c2_28, %c0_29] : memref<4x8xf32, #tpu.memory_space<vmem>>, vector<1x8xf32>
    %45 = vector.broadcast %43 : vector<16x1xf32> to vector<16x8xf32>
    %46 = vector.broadcast %44 : vector<1x8xf32> to vector<16x8xf32>
    %47 = arith.mulf %45, %46 : vector<16x8xf32>
    %48 = math.cos %47 : vector<16x8xf32>
    %c0_30 = arith.constant 0 : index
    %c0_31 = arith.constant 0 : index
    %49 = vector.load %arg4[%c0_30, %c0_31] : memref<8x16xf32, #tpu.memory_space<vmem>>, vector<8x16xf32>
    %cst_32 = arith.constant dense<0.000000e+00> : vector<16x16xf32>
    %50 = tpu.matmul %48, %49, %cst_32 {dimension_numbers = #tpu.dot_dimension_numbers<[1], [0], [0], [1], [0, 0, 1, 1], [], []>} : vector<16x8xf32>, vector<8x16xf32>, vector<16x16xf32> -> vector<16x16xf32>
    %51 = math.sin %47 : vector<16x8xf32>
    %c0_33 = arith.constant 0 : index
    %c0_34 = arith.constant 0 : index
    %52 = vector.load %arg5[%c0_33, %c0_34] : memref<8x16xf32, #tpu.memory_space<vmem>>, vector<8x16xf32>
    %cst_35 = arith.constant dense<0.000000e+00> : vector<16x16xf32>
    %53 = tpu.matmul %51, %52, %cst_35 {dimension_numbers = #tpu.dot_dimension_numbers<[1], [0], [0], [1], [0, 0, 1, 1], [], []>} : vector<16x8xf32>, vector<8x16xf32>, vector<16x16xf32> -> vector<16x16xf32>
    %54 = arith.addf %50, %53 : vector<16x16xf32>
    %55 = vector.broadcast %0 : vector<1x16xf32> to vector<16x16xf32>
    %56 = arith.addf %54, %55 : vector<16x16xf32>
    %cst_36 = arith.constant 0.000000e+00 : f32
    %57 = vector.broadcast %cst_36 : f32 to vector<16x16xf32>
    %58 = arith.maximumf %56, %57 : vector<16x16xf32>
    %59 = arith.truncf %58 : vector<16x16xf32> to vector<16x16xbf16>
    %c0_37 = arith.constant 0 : index
    %c32 = arith.constant 32 : index
    %60 = vector.load %arg12[%c0_37, %c32] : memref<16x64xbf16, #tpu.memory_space<vmem>>, vector<16x16xbf16>
    tpu.vector_store %arg12[%c0_37, %c32], %59 {strides = array<i32>} : memref<16x64xbf16, #tpu.memory_space<vmem>>, vector<16x16xbf16>,
    %c0_38 = arith.constant 0 : index
    %c3 = arith.constant 3 : index
    %61 = vector.load %arg1[%c0_38, %c3] : memref<16x4xf32, #tpu.memory_space<vmem>>, vector<16x1xf32>
    %cst_39 = arith.constant 6.28318548 : f32
    %62 = vector.broadcast %cst_39 : f32 to vector<16x1xf32>
    %63 = arith.mulf %62, %61 : vector<16x1xf32>
    %c3_40 = arith.constant 3 : index
    %c0_41 = arith.constant 0 : index
    %64 = vector.load %arg3[%c3_40, %c0_41] : memref<4x8xf32, #tpu.memory_space<vmem>>, vector<1x8xf32>
    %65 = vector.broadcast %63 : vector<16x1xf32> to vector<16x8xf32>
    %66 = vector.broadcast %64 : vector<1x8xf32> to vector<16x8xf32>
    %67 = arith.mulf %65, %66 : vector<16x8xf32>
    %68 = math.cos %67 : vector<16x8xf32>
    %c0_42 = arith.constant 0 : index
    %c0_43 = arith.constant 0 : index
    %69 = vector.load %arg4[%c0_42, %c0_43] : memref<8x16xf32, #tpu.memory_space<vmem>>, vector<8x16xf32>
    %cst_44 = arith.constant dense<0.000000e+00> : vector<16x16xf32>
    %70 = tpu.matmul %68, %69, %cst_44 {dimension_numbers = #tpu.dot_dimension_numbers<[1], [0], [0], [1], [0, 0, 1, 1], [], []>} : vector<16x8xf32>, vector<8x16xf32>, vector<16x16xf32> -> vector<16x16xf32>
    %71 = math.sin %67 : vector<16x8xf32>
    %c0_45 = arith.constant 0 : index
    %c0_46 = arith.constant 0 : index
    %72 = vector.load %arg5[%c0_45, %c0_46] : memref<8x16xf32, #tpu.memory_space<vmem>>, vector<8x16xf32>
    %cst_47 = arith.constant dense<0.000000e+00> : vector<16x16xf32>
    %73 = tpu.matmul %71, %72, %cst_47 {dimension_numbers = #tpu.dot_dimension_numbers<[1], [0], [0], [1], [0, 0, 1, 1], [], []>} : vector<16x8xf32>, vector<8x16xf32>, vector<16x16xf32> -> vector<16x16xf32>
    %74 = arith.addf %70, %73 : vector<16x16xf32>
    %75 = vector.broadcast %0 : vector<1x16xf32> to vector<16x16xf32>
    %76 = arith.addf %74, %75 : vector<16x16xf32>
    %cst_48 = arith.constant 0.000000e+00 : f32
    %77 = vector.broadcast %cst_48 : f32 to vector<16x16xf32>
    %78 = arith.maximumf %76, %77 : vector<16x16xf32>
    %79 = arith.truncf %78 : vector<16x16xf32> to vector<16x16xbf16>
    %c0_49 = arith.constant 0 : index
    %c48 = arith.constant 48 : index
    %80 = vector.load %arg12[%c0_49, %c48] : memref<16x64xbf16, #tpu.memory_space<vmem>>, vector<16x16xbf16>
    tpu.vector_store %arg12[%c0_49, %c48], %79 {strides = array<i32>} : memref<16x64xbf16, #tpu.memory_space<vmem>>, vector<16x16xbf16>,
    %c0_50 = arith.constant 0 : index
    %c0_51 = arith.constant 0 : index
    %81 = vector.load %arg12[%c0_50, %c0_51] : memref<16x64xbf16, #tpu.memory_space<vmem>>, vector<16x64xbf16>
    %c0_52 = arith.constant 0 : index
    %c0_53 = arith.constant 0 : index
    %82 = vector.load %arg7[%c0_52, %c0_53] : memref<64x32xbf16, #tpu.memory_space<vmem>>, vector<64x32xbf16>
    %cst_54 = arith.constant dense<0.000000e+00> : vector<16x32xf32>
    %83 = tpu.matmul %81, %82, %cst_54 {dimension_numbers = #tpu.dot_dimension_numbers<[1], [0], [0], [1], [0, 0, 1, 1], [], []>} : vector<16x64xbf16>, vector<64x32xbf16>, vector<16x32xf32> -> vector<16x32xf32>
    %c0_55 = arith.constant 0 : index
    %c0_56 = arith.constant 0 : index
    %84 = vector.load %arg2[%c0_55, %c0_56] : memref<16x4xbf16, #tpu.memory_space<vmem>>, vector<16x4xbf16>
    %c0_57 = arith.constant 0 : index
    %c0_58 = arith.constant 0 : index
    %85 = vector.load %arg8[%c0_57, %c0_58] : memref<4x32xbf16, #tpu.memory_space<vmem>>, vector<4x32xbf16>
    %cst_59 = arith.constant dense<0.000000e+00> : vector<16x32xf32>
    %86 = tpu.matmul %84, %85, %cst_59 {dimension_numbers = #tpu.dot_dimension_numbers<[1], [0], [0], [1], [0, 0, 1, 1], [], []>} : vector<16x4xbf16>, vector<4x32xbf16>, vector<16x32xf32> -> vector<16x32xf32>
    %87 = arith.addf %83, %86 : vector<16x32xf32>
    %c0_60 = arith.constant 0 : index
    %c0_61 = arith.constant 0 : index
    %88 = vector.load %arg9[%c0_60, %c0_61] : memref<1x32xf32, #tpu.memory_space<vmem>>, vector<1x32xf32>
    %89 = vector.broadcast %88 : vector<1x32xf32> to vector<16x32xf32>
    %90 = arith.addf %87, %89 : vector<16x32xf32>
    %91 = arith.truncf %90 : vector<16x32xf32> to vector<16x32xbf16>
    %c0_62 = arith.constant 0 : index
    %c0_63 = arith.constant 0 : index
    %92 = vector.load %arg10[%c0_62, %c0_63] : memref<16x32xbf16, #tpu.memory_space<vmem>>, vector<16x32xbf16>
    tpu.vector_store %arg10[%c0_62, %c0_63], %91 {strides = array<i32>} : memref<16x32xbf16, #tpu.memory_space<vmem>>, vector<16x32xbf16>,
    %93 = arith.extf %91 : vector<16x32xbf16> to vector<16x32xf32>
    %94 = arith.mulf %93, %93 : vector<16x32xf32>
    %cst_64 = arith.constant dense<0.000000e+00> : vector<16xf32>
    %95 = vector.multi_reduction <add>, %94, %cst_64 [1] : vector<16x32xf32> to vector<16xf32>
    %96 = vector.shape_cast %95 : vector<16xf32> to vector<16x1xf32>
    %c0_65 = arith.constant 0 : index
    %c0_66 = arith.constant 0 : index
    %97 = vector.load %arg11[%c0_65, %c0_66] : memref<16x1xf32, #tpu.memory_space<vmem>>, vector<16x1xf32>
    tpu.vector_store %arg11[%c0_65, %c0_66], %96 {strides = array<i32>} : memref<16x1xf32, #tpu.memory_space<vmem>>, vector<16x1xf32>,
    return
  }
  func.func @transform_0(%arg0: i32) -> (i32, i32) {
    %c0_i32 = arith.constant 0 : i32
    %c0_i32_0 = arith.constant 0 : i32
    return %arg0, %c0_i32 : i32, i32
  }
  func.func @transform_1(%arg0: i32) -> (i32, i32) {
    %c0_i32 = arith.constant 0 : i32
    %c0_i32_0 = arith.constant 0 : i32
    return %arg0, %c0_i32 : i32, i32
  }
  func.func @transform_2(%arg0: i32) -> (i32, i32) {
    %c0_i32 = arith.constant 0 : i32
    %c0_i32_0 = arith.constant 0 : i32
    %c0_i32_1 = arith.constant 0 : i32
    return %c0_i32, %c0_i32_0 : i32, i32
  }
  func.func @transform_3(%arg0: i32) -> (i32, i32) {
    %c0_i32 = arith.constant 0 : i32
    %c0_i32_0 = arith.constant 0 : i32
    %c0_i32_1 = arith.constant 0 : i32
    return %c0_i32, %c0_i32_0 : i32, i32
  }
  func.func @transform_4(%arg0: i32) -> (i32, i32) {
    %c0_i32 = arith.constant 0 : i32
    %c0_i32_0 = arith.constant 0 : i32
    %c0_i32_1 = arith.constant 0 : i32
    return %c0_i32, %c0_i32_0 : i32, i32
  }
  func.func @transform_5(%arg0: i32) -> (i32, i32) {
    %c0_i32 = arith.constant 0 : i32
    %c0_i32_0 = arith.constant 0 : i32
    %c0_i32_1 = arith.constant 0 : i32
    return %c0_i32, %c0_i32_0 : i32, i32
  }
  func.func @transform_6(%arg0: i32) -> (i32, i32) {
    %c0_i32 = arith.constant 0 : i32
    %c0_i32_0 = arith.constant 0 : i32
    %c0_i32_1 = arith.constant 0 : i32
    return %c0_i32, %c0_i32_0 : i32, i32
  }
  func.func @transform_7(%arg0: i32) -> (i32, i32) {
    %c0_i32 = arith.constant 0 : i32
    %c0_i32_0 = arith.constant 0 : i32
    %c0_i32_1 = arith.constant 0 : i32
    return %c0_i32, %c0_i32_0 : i32, i32
  }
  func.func @transform_8(%arg0: i32) -> (i32, i32) {
    %c0_i32 = arith.constant 0 : i32
    %c0_i32_0 = arith.constant 0 : i32
    %c0_i32_1 = arith.constant 0 : i32
    return %c0_i32, %c0_i32_0 : i32, i32
  }
  func.func @transform_9(%arg0: i32) -> (i32, i32) {
    %c0_i32 = arith.constant 0 : i32
    %c0_i32_0 = arith.constant 0 : i32
    return %arg0, %c0_i32 : i32, i32
  }
  func.func @transform_10(%arg0: i32) -> (i32, i32) {
    %c0_i32 = arith.constant 0 : i32
    %c0_i32_0 = arith.constant 0 : i32
    return %arg0, %c0_i32 : i32, i32
  }
}

</mosaic_0001>

<llo_original>
// kernel: tpu_custom_call.1
$region0: #{tpu_custom_call.1}
  #allocation0 [shape = 'u32[]', space=smem, size = 0x4, offset = 0x4, fixed_abs, tag = 'smem constant byte address 0x4 - core index']
  #allocation1 [shape = 'u32[144,128]{1,0:T(1,128)}', space=vmem, size = 0x12000, scoped, tag = 'internal scratch']
  #allocation2 [shape = 'bf16[16,64]{1,0:T(16,128)(2,1)}', space=vmem, size = 0x1000, scoped, tag = 'scratch operand']
  %s0 = inlined_call_operand.vmem [shape: f32[16,4], index: 0, kind: input, shape index: {}]
  %s1 = inlined_call_operand.vmem [shape: bf16[16,4], index: 1, kind: input, shape index: {}]
  %s2 = inlined_call_operand.vmem [shape: f32[4,8], index: 2, kind: input, shape index: {}]
  %s3 = inlined_call_operand.vmem [shape: f32[8,16], index: 3, kind: input, shape index: {}]
  %s4 = inlined_call_operand.vmem [shape: f32[8,16], index: 4, kind: input, shape index: {}]
  %s5 = inlined_call_operand.vmem [shape: f32[1,16], index: 5, kind: input, shape index: {}]
  %s6 = inlined_call_operand.vmem [shape: bf16[64,32], index: 6, kind: input, shape index: {}]
  %s7 = inlined_call_operand.vmem [shape: bf16[4,32], index: 7, kind: input, shape index: {}]
  %s8 = inlined_call_operand.vmem [shape: f32[1,32], index: 8, kind: input, shape index: {}]
  %s9 = inlined_call_operand.hbm [shape: bf16[16,32], index: 9, kind: output, shape index: {0}]
  %s10 = inlined_call_operand.vmem [shape: f32[16,1], index: 10, kind: output, shape index: {1}]
  %11 = xla_tuple %s9, %s10
  %s12 = sld [smem:[#allocation0]]
  $region54: #{tpu_custom_call.1} parent=0
    _
  %s14 = ssub.s32 1, %s12
  %s15 = scalar_select 0, %s14, %s12
  $region1: #{tpu_custom_call.1} parent=0
    #allocation3 [shape = 'u8[4096]{0}', space=vmem, size = 0x1000, scoped, tag = 'output window, operand 0, single buffered']
    #allocation4 [shape = 's32[1]{0}', space=sflag, size = 0x4, scoped, tag = 'scoped memory for tpu_custom_call.1']
    %16 = vsyncpa [#allocation4], 0
    // Predicated region
    $region2: #{tpu_custom_call.1} parent=1 // pred_check
      _
    $region3: #{tpu_custom_call.1} parent=1 // pred_check_branch
      %18 = sbr.rel (0) target = $region5
    $region4: #{tpu_custom_call.1} parent=1 // pred_region
      _
    $region5: #{tpu_custom_call.1} parent=1 // pred_fallthru
      _
    // Predicated region
    $region6: #{tpu_custom_call.1} parent=1 // pred_check
      _
    $region7: #{tpu_custom_call.1} parent=1 // pred_check_branch
      %20 = sbr.rel (0) target = $region9
    $region8: #{tpu_custom_call.1} parent=1 // pred_region
      _
    $region9: #{tpu_custom_call.1} parent=1 // pred_fallthru
      _
    // Predicated region
    $region10: #{tpu_custom_call.1} parent=1 // pred_check
      _
    $region11: #{tpu_custom_call.1} parent=1 // pred_check_branch
      %22 = sbr.rel (0) target = $region13
    $region12: #{tpu_custom_call.1} parent=1 // pred_region
      _
    $region13: #{tpu_custom_call.1} parent=1 // pred_fallthru
      _
    // Predicated region
    $region14: #{tpu_custom_call.1} parent=1 // pred_check
      _
    $region15: #{tpu_custom_call.1} parent=1 // pred_check_branch
      %24 = sbr.rel (0) target = $region17
    $region16: #{tpu_custom_call.1} parent=1 // pred_region
      _
    $region17: #{tpu_custom_call.1} parent=1 // pred_fallthru
      _
    // Predicated region
    $region18: #{tpu_custom_call.1} parent=1 // pred_check
      _
    $region19: #{tpu_custom_call.1} parent=1 // pred_check_branch
      %26 = sbr.rel (0) target = $region21
    $region20: #{tpu_custom_call.1} parent=1 // pred_region
      _
    $region21: #{tpu_custom_call.1} parent=1 // pred_fallthru
      _
    // Predicated region
    $region22: #{tpu_custom_call.1} parent=1 // pred_check
      _
    $region23: #{tpu_custom_call.1} parent=1 // pred_check_branch
      %28 = sbr.rel (0) target = $region25
    $region24: #{tpu_custom_call.1} parent=1 // pred_region
      _
    $region25: #{tpu_custom_call.1} parent=1 // pred_fallthru
      _
    // Predicated region
    $region26: #{tpu_custom_call.1} parent=1 // pred_check
      _
    $region27: #{tpu_custom_call.1} parent=1 // pred_check_branch
      %30 = sbr.rel (0) target = $region29
    $region28: #{tpu_custom_call.1} parent=1 // pred_region
      _
    $region29: #{tpu_custom_call.1} parent=1 // pred_fallthru
      _
    // Predicated region
    $region30: #{tpu_custom_call.1} parent=1 // pred_check
      _
    $region31: #{tpu_custom_call.1} parent=1 // pred_check_branch
      %32 = sbr.rel (0) target = $region33
    $region32: #{tpu_custom_call.1} parent=1 // pred_region
      _
    $region33: #{tpu_custom_call.1} parent=1 // pred_fallthru
      _
    // Predicated region
    $region34: #{tpu_custom_call.1} parent=1 // pred_check
      _
    $region35: #{tpu_custom_call.1} parent=1 // pred_check_branch
      %34 = sbr.rel (0) target = $region37
    $region36: #{tpu_custom_call.1} parent=1 // pred_region
      _
    $region37: #{tpu_custom_call.1} parent=1 // pred_fallthru
      _
    %v36 = vld [vmem:[%s5] sm:$0x1]
    %v37 = vld [vmem:[%s0] sm:$0xff]
    %v38 = vld [vmem:[%s0 + $0x8] sm:$0xff]
    %v39 = vmul.f32 %v37, 6.2831855
    %v40 = vmul.f32 %v38, 6.2831855
    %v41 = vld [vmem:[%s2] sm:$0x1]
    %43 = vset.pattern.permute.xlu0 0
    %44 = vperm.xlu0 %43, %v39
    %v45 = vpop.permute.xlu0 %44
    %48 = vset.pattern.permute.xlu0 0
    %49 = vperm.xlu0 %48, %v40
    %v50 = vpop.permute.xlu0 %49
    %v52 = vlaneseq
    %v53 = vshrl.u32 %v52, 7
    %v54 = vsub.s32 0, %v53
    %v55 = vrot.slane %v41, %v54
    %v56 = vmul.f32 %v45, %v55
    %v57 = vmul.f32 %v50, %v55
    %v58 = vand.u32 2147483647, %v56
    %vm59 = vcmp.le.f32.partialorder %v58, 0.7853982
    %vm60 = vcmp.lt.s32.totalorder %v56, 0
    %v61 = vand.u32 %v56, 2139095040
    %v62 = vshrl.u32 %v61, 23
    %v63 = vsub.s32 %v62, 127
    %v64 = vand.u32 2147483647, %v56
    %v65 = vand.u32 %v64, 8388607
    %v66 = vor.u32 %v65, 8388608
    %v67 = vsub.s32 0, %v66
    %v68 = vadd.s32 %v63, 1
    %vm69 = vcmp.gt.s32.totalorder %v68, 0
    %v70 = vsel %vm69, %v68, 0
    %v71 = vshrl.u32 %v70, 5
    %v72 = vand.u32 %v70, 31
    %v73 = vsub.s32 32, %v72
    %v74 = vshrl.u32 683565275, %v73
    %v75 = vshll.u32 683565275, %v72
    %v76 = vshrl.u32 2475754826, %v73
    %v77 = vor.u32 %v75, %v76
    %v78 = vshll.u32 2475754826, %v72
    %v79 = vshrl.u32 2131351028, %v73
    %v80 = vor.u32 %v78, %v79
    %v81 = vshll.u32 2131351028, %v72
    %v82 = vshrl.u32 2102212464, %v73
    %v83 = vor.u32 %v81, %v82
    %v84 = vshll.u32 2102212464, %v72
    %v85 = vshrl.u32 920167782, %v73
    %v86 = vor.u32 %v84, %v85
    %v87 = vshll.u32 920167782, %v72
    %v88 = vshrl.u32 1326507024, %v73
    %v89 = vor.u32 %v87, %v88
    %vm90 = vcmp.lt.s32.totalorder %v71, 1
    %vm91 = vcmp.lt.s32.totalorder %v71, 2
    %vm92 = vcmp.lt.s32.totalorder %v71, 3
    %vm93 = vcmp.lt.s32.totalorder %v71, 4
    %v94 = vsel %vm90, %v74, %v77
    %v95 = vsel %vm93, %v83, 2102212464
    %v96 = vsel %vm92, %v80, %v95
    %v97 = vsel %vm91, %v94, %v96
    %v98 = vsel %vm90, %v77, %v80
    %v99 = vsel %vm93, %v86, 920167782
    %v100 = vsel %vm92, %v83, %v99
    %v101 = vsel %vm91, %v98, %v100
    %v102 = vsel %vm90, %v80, %v83
    %v103 = vsel %vm93, %v89, 1326507024
    %v104 = vsel %vm92, %v86, %v103
    %v105 = vsel %vm91, %v102, %v104
    %v106 = vshll.u32 %v66, 8
    %v107 = vmul.u32.u64.compose %v106, %v105
    %v108 = vextract.low.u32 %v107
    %v109 = vextract.high.u32 %v107
    %v110 = vmul.u32.u64.compose %v106, %v101
    %v111 = vextract.low.u32 %v110
    %v112 = vextract.high.u32 %v110
    %v113 = vmul.u32 %v106, %v97
    %v114 = vadd.s32 %v109, %v111
    %vm115 = vc.u32 %v109, %v111
    %v116 = vadd.s32 %v112, 1
    %v117 = vsel %vm115, %v116, %v112
    %v118 = vadd.s32 %v113, %v117
    %v119 = vadd.s32 %v118, 536870912
    %v120 = vshrl.u32 %v119, 30
    %v121 = vshll.u32 %v120, 30
    %v122 = vsub.s32 %v118, %v121
    %vm123 = vcmp.lt.s32.totalorder %v122, 0
    %v124 = vsub.s32 0, %v122
    %v125 = vsel %vm123, %v124, %v122
    %v126 = vclz %v125
    %v127 = vsub.s32 %v126, 2
    %vm128 = vcmp.gt.s32.totalorder 0, %v127
    %v129 = vsel %vm128, 0, %v127
    %v130 = vsub.s32 32, %v129
    %v131 = vshll.u32 %v122, %v129
    %v132 = vshrl.u32 %v114, %v130
    %v133 = vor.u32 %v131, %v132
    %v134 = vsub.s32 4294967266, %v129
    %v135 = vadd.s32 %v134, 127
    %v136 = vshll.u32 %v135, 23
    %v137 = vor.u32 4788187, %v136
    %v138 = vand.u32 2147483647, %v137
    %v140 = vcvt.s32.f32 %v133
    %v141 = vmul.f32 %v140, %v138
    %v142 = vxor.u32 %v141, 2147483648
    %v143 = vsel %vm60, %v142, %v141
    %v144 = vsub.s32 4, %v120
    %v145 = vsel %vm60, %v144, %v120
    %v146 = vsel %vm59, %v56, %v143
    %v147 = vsel %vm59, 0, %v145
    %v148 = vcosq.f32.pop %v146
    %v149 = vsinq.f32.pop %v146
    %vm150 = vweird.f32 %v56
    %v151 = vand.u32 %v147, 3
    %vm152 = vcmp.lt.s32.totalorder %v151, 2
    %vm153 = vcmp.eq.s32.totalorder %v151, 0
    %v154 = vxor.u32 %v149, 2147483648
    %v155 = vsel %vm153, %v148, %v154
    %vm156 = vcmp.eq.s32.totalorder %v151, 2
    %v157 = vxor.u32 %v148, 2147483648
    %v158 = vsel %vm156, %v157, %v149
    %v159 = vsel %vm152, %v155, %v158
    %v160 = vsel %vm150, nan, %v159
    %v161 = vand.u32 2147483647, %v57
    %vm162 = vcmp.le.f32.partialorder %v161, 0.7853982
    %vm163 = vcmp.lt.s32.totalorder %v57, 0
    %v164 = vand.u32 %v57, 2139095040
    %v165 = vshrl.u32 %v164, 23
    %v166 = vsub.s32 %v165, 127
    %v167 = vand.u32 2147483647, %v57
    %v168 = vand.u32 %v167, 8388607
    %v169 = vor.u32 %v168, 8388608
    %v170 = vsub.s32 0, %v169
    %v171 = vadd.s32 %v166, 1
    %vm172 = vcmp.gt.s32.totalorder %v171, 0
    %v173 = vsel %vm172, %v171, 0
    %v174 = vshrl.u32 %v173, 5
    %v175 = vand.u32 %v173, 31
    %v176 = vsub.s32 32, %v175
    %v177 = vshrl.u32 683565275, %v176
    %v178 = vshll.u32 683565275, %v175
    %v179 = vshrl.u32 2475754826, %v176
    %v180 = vor.u32 %v178, %v179
    %v181 = vshll.u32 2475754826, %v175
    %v182 = vshrl.u32 2131351028, %v176
    %v183 = vor.u32 %v181, %v182
    %v184 = vshll.u32 2131351028, %v175
    %v185 = vshrl.u32 2102212464, %v176
    %v186 = vor.u32 %v184, %v185
    %v187 = vshll.u32 2102212464, %v175
    %v188 = vshrl.u32 920167782, %v176
    %v189 = vor.u32 %v187, %v188
    %v190 = vshll.u32 920167782, %v175
    %v191 = vshrl.u32 1326507024, %v176
    %v192 = vor.u32 %v190, %v191
    %vm193 = vcmp.lt.s32.totalorder %v174, 1
    %vm194 = vcmp.lt.s32.totalorder %v174, 2
    %vm195 = vcmp.lt.s32.totalorder %v174, 3
    %vm196 = vcmp.lt.s32.totalorder %v174, 4
    %v197 = vsel %vm193, %v177, %v180
    %v198 = vsel %vm196, %v186, 2102212464
    %v199 = vsel %vm195, %v183, %v198
    %v200 = vsel %vm194, %v197, %v199
    %v201 = vsel %vm193, %v180, %v183
    %v202 = vsel %vm196, %v189, 920167782
    %v203 = vsel %vm195, %v186, %v202
    %v204 = vsel %vm194, %v201, %v203
    %v205 = vsel %vm193, %v183, %v186
    %v206 = vsel %vm196, %v192, 1326507024
    %v207 = vsel %vm195, %v189, %v206
    %v208 = vsel %vm194, %v205, %v207
    %v209 = vshll.u32 %v169, 8
    %v210 = vmul.u32.u64.compose %v209, %v208
    %v211 = vextract.low.u32 %v210
    %v212 = vextract.high.u32 %v210
    %v213 = vmul.u32.u64.compose %v209, %v204
    %v214 = vextract.low.u32 %v213
    %v215 = vextract.high.u32 %v213
    %v216 = vmul.u32 %v209, %v200
    %v217 = vadd.s32 %v212, %v214
    %vm218 = vc.u32 %v212, %v214
    %v219 = vadd.s32 %v215, 1
    %v220 = vsel %vm218, %v219, %v215
    %v221 = vadd.s32 %v216, %v220
    %v222 = vadd.s32 %v221, 536870912
    %v223 = vshrl.u32 %v222, 30
    %v224 = vshll.u32 %v223, 30
    %v225 = vsub.s32 %v221, %v224
    %vm226 = vcmp.lt.s32.totalorder %v225, 0
    %v227 = vsub.s32 0, %v225
    %v228 = vsel %vm226, %v227, %v225
    %v229 = vclz %v228
    %v230 = vsub.s32 %v229, 2
    %vm231 = vcmp.gt.s32.totalorder 0, %v230
    %v232 = vsel %vm231, 0, %v230
    %v233 = vsub.s32 32, %v232
    %v234 = vshll.u32 %v225, %v232
    %v235 = vshrl.u32 %v217, %v233
    %v236 = vor.u32 %v234, %v235
    %v237 = vsub.s32 4294967266, %v232
    %v238 = vadd.s32 %v237, 127
    %v239 = vshll.u32 %v238, 23
    %v240 = vor.u32 4788187, %v239
    %v241 = vand.u32 2147483647, %v240
    %v243 = vcvt.s32.f32 %v236
    %v244 = vmul.f32 %v243, %v241
    %v245 = vxor.u32 %v244, 2147483648
    %v246 = vsel %vm163, %v245, %v244
    %v247 = vsub.s32 4, %v223
    %v248 = vsel %vm163, %v247, %v223
    %v249 = vsel %vm162, %v57, %v246
    %v250 = vsel %vm162, 0, %v248
    %v251 = vcosq.f32.pop %v249
    %v252 = vsinq.f32.pop %v249
    %vm253 = vweird.f32 %v57
    %v254 = vand.u32 %v250, 3
    %vm255 = vcmp.lt.s32.totalorder %v254, 2
    %vm256 = vcmp.eq.s32.totalorder %v254, 0
    %v257 = vxor.u32 %v252, 2147483648
    %v258 = vsel %vm256, %v251, %v257
    %vm259 = vcmp.eq.s32.totalorder %v254, 2
    %v260 = vxor.u32 %v251, 2147483648
    %v261 = vsel %vm259, %v260, %v252
    %v262 = vsel %vm255, %v258, %v261
    %v263 = vsel %vm253, nan, %v262
    %v264 = vld [vmem:[%s3] sm:$0xff]
    %v265 = vand.u32 2147483647, %v56
    %vm266 = vcmp.le.f32.partialorder %v265, 0.7853982
    %vm267 = vcmp.lt.s32.totalorder %v56, 0
    %v268 = vand.u32 %v56, 2139095040
    %v269 = vshrl.u32 %v268, 23
    %v270 = vsub.s32 %v269, 127
    %v271 = vand.u32 2147483647, %v56
    %v272 = vand.u32 %v271, 8388607
    %v273 = vor.u32 %v272, 8388608
    %v274 = vsub.s32 0, %v273
    %v275 = vadd.s32 %v270, 1
    %vm276 = vcmp.gt.s32.totalorder %v275, 0
    %v277 = vsel %vm276, %v275, 0
    %v278 = vshrl.u32 %v277, 5
    %v279 = vand.u32 %v277, 31
    %v280 = vsub.s32 32, %v279
    %v281 = vshrl.u32 683565275, %v280
    %v282 = vshll.u32 683565275, %v279
    %v283 = vshrl.u32 2475754826, %v280
    %v284 = vor.u32 %v282, %v283
    %v285 = vshll.u32 2475754826, %v279
    %v286 = vshrl.u32 2131351028, %v280
    %v287 = vor.u32 %v285, %v286
    %v288 = vshll.u32 2131351028, %v279
    %v289 = vshrl.u32 2102212464, %v280
    %v290 = vor.u32 %v288, %v289
    %v291 = vshll.u32 2102212464, %v279
    %v292 = vshrl.u32 920167782, %v280
    %v293 = vor.u32 %v291, %v292
    %v294 = vshll.u32 920167782, %v279
    %v295 = vshrl.u32 1326507024, %v280
    %v296 = vor.u32 %v294, %v295
    %vm297 = vcmp.lt.s32.totalorder %v278, 1
    %vm298 = vcmp.lt.s32.totalorder %v278, 2
    %vm299 = vcmp.lt.s32.totalorder %v278, 3
    %vm300 = vcmp.lt.s32.totalorder %v278, 4
    %v301 = vsel %vm297, %v281, %v284
    %v302 = vsel %vm300, %v290, 2102212464
    %v303 = vsel %vm299, %v287, %v302
    %v304 = vsel %vm298, %v301, %v303
    %v305 = vsel %vm297, %v284, %v287
    %v306 = vsel %vm300, %v293, 920167782
    %v307 = vsel %vm299, %v290, %v306
    %v308 = vsel %vm298, %v305, %v307
    %v309 = vsel %vm297, %v287, %v290
    %v310 = vsel %vm300, %v296, 1326507024
    %v311 = vsel %vm299, %v293, %v310
    %v312 = vsel %vm298, %v309, %v311
    %v313 = vshll.u32 %v273, 8
    %v314 = vmul.u32.u64.compose %v313, %v312
    %v315 = vextract.low.u32 %v314
    %v316 = vextract.high.u32 %v314
    %v317 = vmul.u32.u64.compose %v313, %v308
    %v318 = vextract.low.u32 %v317
    %v319 = vextract.high.u32 %v317
    %v320 = vmul.u32 %v313, %v304
    %v321 = vadd.s32 %v316, %v318
    %vm322 = vc.u32 %v316, %v318
    %v323 = vadd.s32 %v319, 1
    %v324 = vsel %vm322, %v323, %v319
    %v325 = vadd.s32 %v320, %v324
    %v326 = vadd.s32 %v325, 536870912
    %v327 = vshrl.u32 %v326, 30
    %v328 = vshll.u32 %v327, 30
    %v329 = vsub.s32 %v325, %v328
    %vm330 = vcmp.lt.s32.totalorder %v329, 0
    %v331 = vsub.s32 0, %v329
    %v332 = vsel %vm330, %v331, %v329
    %v333 = vclz %v332
    %v334 = vsub.s32 %v333, 2
    %vm335 = vcmp.gt.s32.totalorder 0, %v334
    %v336 = vsel %vm335, 0, %v334
    %v337 = vsub.s32 32, %v336
    %v338 = vshll.u32 %v329, %v336
    %v339 = vshrl.u32 %v321, %v337
    %v340 = vor.u32 %v338, %v339
    %v341 = vsub.s32 4294967266, %v336
    %v342 = vadd.s32 %v341, 127
    %v343 = vshll.u32 %v342, 23
    %v344 = vor.u32 4788187, %v343
    %v345 = vand.u32 2147483647, %v344
    %v347 = vcvt.s32.f32 %v340
    %v348 = vmul.f32 %v347, %v345
    %v349 = vxor.u32 %v348, 2147483648
    %v350 = vsel %vm267, %v349, %v348
    %v351 = vsub.s32 4, %v327
    %v352 = vsel %vm267, %v351, %v327
    %v353 = vsel %vm266, %v56, %v350
    %v354 = vsel %vm266, 0, %v352
    %v355 = vcosq.f32.pop %v353
    %v356 = vsinq.f32.pop %v353
    %vm357 = vweird.f32 %v56
    %v358 = vadd.s32 %v354, 3
    %v359 = vand.u32 %v358, 3
    %vm360 = vcmp.lt.s32.totalorder %v359, 2
    %vm361 = vcmp.eq.s32.totalorder %v359, 0
    %v362 = vxor.u32 %v356, 2147483648
    %v363 = vsel %vm361, %v355, %v362
    %vm364 = vcmp.eq.s32.totalorder %v359, 2
    %v365 = vxor.u32 %v355, 2147483648
    %v366 = vsel %vm364, %v365, %v356
    %v367 = vsel %vm360, %v363, %v366
    %v368 = vsel %vm357, nan, %v367
    %v369 = vand.u32 2147483647, %v57
    %vm370 = vcmp.le.f32.partialorder %v369, 0.7853982
    %vm371 = vcmp.lt.s32.totalorder %v57, 0
    %v372 = vand.u32 %v57, 2139095040
    %v373 = vshrl.u32 %v372, 23
    %v374 = vsub.s32 %v373, 127
    %v375 = vand.u32 2147483647, %v57
    %v376 = vand.u32 %v375, 8388607
    %v377 = vor.u32 %v376, 8388608
    %v378 = vsub.s32 0, %v377
    %v379 = vadd.s32 %v374, 1
    %vm380 = vcmp.gt.s32.totalorder %v379, 0
    %v381 = vsel %vm380, %v379, 0
    %v382 = vshrl.u32 %v381, 5
    %v383 = vand.u32 %v381, 31
    %v384 = vsub.s32 32, %v383
    %v385 = vshrl.u32 683565275, %v384
    %v386 = vshll.u32 683565275, %v383
    %v387 = vshrl.u32 2475754826, %v384
    %v388 = vor.u32 %v386, %v387
    %v389 = vshll.u32 2475754826, %v383
    %v390 = vshrl.u32 2131351028, %v384
    %v391 = vor.u32 %v389, %v390
    %v392 = vshll.u32 2131351028, %v383
    %v393 = vshrl.u32 2102212464, %v384
    %v394 = vor.u32 %v392, %v393
    %v395 = vshll.u32 2102212464, %v383
    %v396 = vshrl.u32 920167782, %v384
    %v397 = vor.u32 %v395, %v396
    %v398 = vshll.u32 920167782, %v383
    %v399 = vshrl.u32 1326507024, %v384
    %v400 = vor.u32 %v398, %v399
    %vm401 = vcmp.lt.s32.totalorder %v382, 1
    %vm402 = vcmp.lt.s32.totalorder %v382, 2
    %vm403 = vcmp.lt.s32.totalorder %v382, 3
    %vm404 = vcmp.lt.s32.totalorder %v382, 4
    %v405 = vsel %vm401, %v385, %v388
    %v406 = vsel %vm404, %v394, 2102212464
    %v407 = vsel %vm403, %v391, %v406
    %v408 = vsel %vm402, %v405, %v407
    %v409 = vsel %vm401, %v388, %v391
    %v410 = vsel %vm404, %v397, 920167782
    %v411 = vsel %vm403, %v394, %v410
    %v412 = vsel %vm402, %v409, %v411
    %v413 = vsel %vm401, %v391, %v394
    %v414 = vsel %vm404, %v400, 1326507024
    %v415 = vsel %vm403, %v397, %v414
    %v416 = vsel %vm402, %v413, %v415
    %v417 = vshll.u32 %v377, 8
    %v418 = vmul.u32.u64.compose %v417, %v416
    %v419 = vextract.low.u32 %v418
    %v420 = vextract.high.u32 %v418
    %v421 = vmul.u32.u64.compose %v417, %v412
    %v422 = vextract.low.u32 %v421
    %v423 = vextract.high.u32 %v421
    %v424 = vmul.u32 %v417, %v408
    %v425 = vadd.s32 %v420, %v422
    %vm426 = vc.u32 %v420, %v422
    %v427 = vadd.s32 %v423, 1
    %v428 = vsel %vm426, %v427, %v423
    %v429 = vadd.s32 %v424, %v428
    %v430 = vadd.s32 %v429, 536870912
    %v431 = vshrl.u32 %v430, 30
    %v432 = vshll.u32 %v431, 30
    %v433 = vsub.s32 %v429, %v432
    %vm434 = vcmp.lt.s32.totalorder %v433, 0
    %v435 = vsub.s32 0, %v433
    %v436 = vsel %vm434, %v435, %v433
    %v437 = vclz %v436
    %v438 = vsub.s32 %v437, 2
    %vm439 = vcmp.gt.s32.totalorder 0, %v438
    %v440 = vsel %vm439, 0, %v438
    %v441 = vsub.s32 32, %v440
    %v442 = vshll.u32 %v433, %v440
    %v443 = vshrl.u32 %v425, %v441
    %v444 = vor.u32 %v442, %v443
    %v445 = vsub.s32 4294967266, %v440
    %v446 = vadd.s32 %v445, 127
    %v447 = vshll.u32 %v446, 23
    %v448 = vor.u32 4788187, %v447
    %v449 = vand.u32 2147483647, %v448
    %v451 = vcvt.s32.f32 %v444
    %v452 = vmul.f32 %v451, %v449
    %v453 = vxor.u32 %v452, 2147483648
    %v454 = vsel %vm371, %v453, %v452
    %v455 = vsub.s32 4, %v431
    %v456 = vsel %vm371, %v455, %v431
    %v457 = vsel %vm370, %v57, %v454
    %v458 = vsel %vm370, 0, %v456
    %v459 = vcosq.f32.pop %v457
    %v460 = vsinq.f32.pop %v457
    %vm461 = vweird.f32 %v57
    %v462 = vadd.s32 %v458, 3
    %v463 = vand.u32 %v462, 3
    %vm464 = vcmp.lt.s32.totalorder %v463, 2
    %vm465 = vcmp.eq.s32.totalorder %v463, 0
    %v466 = vxor.u32 %v460, 2147483648
    %v467 = vsel %vm465, %v459, %v466
    %vm468 = vcmp.eq.s32.totalorder %v463, 2
    %v469 = vxor.u32 %v459, 2147483648
    %v470 = vsel %vm468, %v469, %v460
    %v471 = vsel %vm464, %v467, %v470
    %v472 = vsel %vm461, nan, %v471
    %v473 = vld [vmem:[%s4] sm:$0xff]
    %vm474 = vcmask 64512
    %v476 = vsel %vm474, %v368, 0
    %v479 = vsel %vm474, %v472, 0
    %481 = vmatprep.subr.mxu0 0.0
    %482 = vmatpush1.msra.mxu0 %v473
    %483 = vmatprep.subr.mxu0 0.0
    %484 = vmatpush1.msra.mxu0 0.0
    %485 = vmatprep.subr.mxu0 0.0
    %486 = vmatpush1.msra.mxu0 0.0
    %487 = vmatprep.subr.mxu0 0.0
    %488 = vmatpush1.msra.mxu0 0.0
    %489 = vmatprep.subr.mxu0 0.0
    %490 = vmatpush1.msra.mxu0 0.0
    %491 = vmatprep.subr.mxu0 0.0
    %492 = vmatpush1.msra.mxu0 0.0
    %493 = vmatprep.subr.mxu0 0.0
    %494 = vmatpush1.msra.mxu0 0.0
    %495 = vmatprep.subr.mxu0 0.0
    %496 = vmatpush1.msra.mxu0 0.0
    %497 = vmatprep.subr.mxu0 0.0
    %498 = vmatpush1.msra.mxu0 0.0
    %499 = vmatprep.subr.mxu0 0.0
    %500 = vmatpush1.msra.mxu0 0.0
    %501 = vmatprep.subr.mxu0 0.0
    %502 = vmatpush1.msra.mxu0 0.0
    %503 = vmatprep.subr.mxu0 0.0
    %504 = vmatpush1.msra.mxu0 0.0
    %505 = vmatprep.subr.mxu0 0.0
    %506 = vmatpush1.msra.mxu0 0.0
    %507 = vmatprep.subr.mxu0 0.0
    %508 = vmatpush1.msra.mxu0 0.0
    %509 = vmatprep.subr.mxu0 0.0
    %510 = vmatpush1.msra.mxu0 0.0
    %511 = vmatprep.subr.mxu0 0.0
    %512 = vmatpush1.msra.mxu0 0.0
    %513 = vmatprep.subr.mxu0 0.0
    %514 = vmatpush1.msra.mxu0 0.0
    %515 = vmatprep.subr.mxu0 0.0
    %516 = vmatpush1.msra.mxu0 0.0
    %517 = vmatprep.subr.mxu0 0.0
    %518 = vmatpush1.msra.mxu0 0.0
    %519 = vmatprep.subr.mxu0 0.0
    %520 = vmatpush1.msra.mxu0 0.0
    %521 = vmatprep.subr.mxu0 0.0
    %522 = vmatpush1.msra.mxu0 0.0
    %523 = vmatprep.subr.mxu0 0.0
    %524 = vmatpush1.msra.mxu0 0.0
    %525 = vmatprep.subr.mxu0 0.0
    %526 = vmatpush1.msra.mxu0 0.0
    %527 = vmatprep.subr.mxu0 0.0
    %528 = vmatpush1.msra.mxu0 0.0
    %529 = vmatprep.subr.mxu0 0.0
    %530 = vmatpush1.msra.mxu0 0.0
    %531 = vmatprep.subr.mxu0 0.0
    %532 = vmatpush1.msra.mxu0 0.0
    %533 = vmatprep.subr.mxu0 0.0
    %534 = vmatpush1.msra.mxu0 0.0
    %535 = vmatprep.subr.mxu0 0.0
    %536 = vmatpush1.msra.mxu0 0.0
    %537 = vmatprep.subr.mxu0 0.0
    %538 = vmatpush1.msra.mxu0 0.0
    %539 = vmatprep.subr.mxu0 0.0
    %540 = vmatpush1.msra.mxu0 0.0
    %541 = vmatprep.subr.mxu0 0.0
    %542 = vmatpush1.msra.mxu0 0.0
    %543 = vmatprep.subr.mxu0 0.0
    %544 = vmatpush1.msra.mxu0 0.0
    %545 = vmatprep.mubr.f32.mxu0 0.0
    %546 = vmatmul.mubr.f32.gmra.mrb[0].mxu0 %v476
    %v547 = vpop.f32.mrb[0].mxu0
    %v548 = vadd.f32 0.0, %v547
    %v549 = vpop.f32.mrb[0].mxu0
    %550 = vmatprep.mubr.f32.mxu0 0.0
    %551 = vmatmul.mubr.f32.gmra.mrb[0].mxu0 %v479
    %v552 = vpop.f32.mrb[0].mxu0
    %v553 = vadd.f32 0.0, %v552
    %v554 = vpop.f32.mrb[0].mxu0
    %555 = vdwg.mxu0
    %v557 = vsel %vm474, %v160, 0
    %v560 = vsel %vm474, %v263, 0
    %562 = vmatprep.subr.mxu0 0.0
    %563 = vmatpush1.msra.mxu0 %v264
    %564 = vmatprep.subr.mxu0 0.0
    %565 = vmatpush1.msra.mxu0 0.0
    %566 = vmatprep.subr.mxu0 0.0
    %567 = vmatpush1.msra.mxu0 0.0
    %568 = vmatprep.subr.mxu0 0.0
    %569 = vmatpush1.msra.mxu0 0.0
    %570 = vmatprep.subr.mxu0 0.0
    %571 = vmatpush1.msra.mxu0 0.0
    %572 = vmatprep.subr.mxu0 0.0
    %573 = vmatpush1.msra.mxu0 0.0
    %574 = vmatprep.subr.mxu0 0.0
    %575 = vmatpush1.msra.mxu0 0.0
    %576 = vmatprep.subr.mxu0 0.0
    %577 = vmatpush1.msra.mxu0 0.0
    %578 = vmatprep.subr.mxu0 0.0
    %579 = vmatpush1.msra.mxu0 0.0
    %580 = vmatprep.subr.mxu0 0.0
    %581 = vmatpush1.msra.mxu0 0.0
    %582 = vmatprep.subr.mxu0 0.0
    %583 = vmatpush1.msra.mxu0 0.0
    %584 = vmatprep.subr.mxu0 0.0
    %585 = vmatpush1.msra.mxu0 0.0
    %586 = vmatprep.subr.mxu0 0.0
    %587 = vmatpush1.msra.mxu0 0.0
    %588 = vmatprep.subr.mxu0 0.0
    %589 = vmatpush1.msra.mxu0 0.0
    %590 = vmatprep.subr.mxu0 0.0
    %591 = vmatpush1.msra.mxu0 0.0
    %592 = vmatprep.subr.mxu0 0.0
    %593 = vmatpush1.msra.mxu0 0.0
    %594 = vmatprep.subr.mxu0 0.0
    %595 = vmatpush1.msra.mxu0 0.0
    %596 = vmatprep.subr.mxu0 0.0
    %597 = vmatpush1.msra.mxu0 0.0
    %598 = vmatprep.subr.mxu0 0.0
    %599 = vmatpush1.msra.mxu0 0.0
    %600 = vmatprep.subr.mxu0 0.0
    %601 = vmatpush1.msra.mxu0 0.0
    %602 = vmatprep.subr.mxu0 0.0
    %603 = vmatpush1.msra.mxu0 0.0
    %604 = vmatprep.subr.mxu0 0.0
    %605 = vmatpush1.msra.mxu0 0.0
    %606 = vmatprep.subr.mxu0 0.0
    %607 = vmatpush1.msra.mxu0 0.0
    %608 = vmatprep.subr.mxu0 0.0
    %609 = vmatpush1.msra.mxu0 0.0
    %610 = vmatprep.subr.mxu0 0.0
    %611 = vmatpush1.msra.mxu0 0.0
    %612 = vmatprep.subr.mxu0 0.0
    %613 = vmatpush1.msra.mxu0 0.0
    %614 = vmatprep.subr.mxu0 0.0
    %615 = vmatpush1.msra.mxu0 0.0
    %616 = vmatprep.subr.mxu0 0.0
    %617 = vmatpush1.msra.mxu0 0.0
    %618 = vmatprep.subr.mxu0 0.0
    %619 = vmatpush1.msra.mxu0 0.0
    %620 = vmatprep.subr.mxu0 0.0
    %621 = vmatpush1.msra.mxu0 0.0
    %622 = vmatprep.subr.mxu0 0.0
    %623 = vmatpush1.msra.mxu0 0.0
    %624 = vmatprep.subr.mxu0 0.0
    %625 = vmatpush1.msra.mxu0 0.0
    %626 = vmatprep.mubr.f32.mxu0 0.0
    %627 = vmatmul.mubr.f32.gmra.mrb[0].mxu0 %v557
    %v628 = vpop.f32.mrb[0].mxu0
    %v629 = vadd.f32 %v548, %v628
    %v630 = vpop.f32.mrb[0].mxu0
    %631 = vmatprep.mubr.f32.mxu0 0.0
    %632 = vmatmul.mubr.f32.gmra.mrb[0].mxu0 %v560
    %v633 = vpop.f32.mrb[0].mxu0
    %v634 = vadd.f32 %v553, %v633
    %v635 = vpop.f32.mrb[0].mxu0
    %636 = vdwg.mxu0
    %v638 = vlaneseq
    %v639 = vshrl.u32 %v638, 7
    %v640 = vsub.s32 0, %v639
    %v641 = vrot.slane %v36, %v640
    %v643 = vadd.f32 %v629, %v641
    %v644 = vadd.f32 %v634, %v641
    %v645 = vmax.f32 %v643, 0.0
    %v646 = vmax.f32 %v644, 0.0
    %v647 = vpack.c.bf16 %v646, %v645
    %vm648 = vcmask 130048
    %649 = vst.msk [vmem:[#allocation2] sm:$0xff] %vm648, %v647
    %v650 = vld [vmem:[%s0] sm:$0xff]
    %v651 = vld [vmem:[%s0 + $0x8] sm:$0xff]
    %v652 = vmul.f32 %v650, 6.2831855
    %v653 = vmul.f32 %v651, 6.2831855
    %v654 = vld [vmem:[%s2 + $0x1] sm:$0x1]
    %656 = vset.pattern.permute.xlu0 1
    %657 = vperm.xlu0 %656, %v652
    %v658 = vpop.permute.xlu0 %657
    %661 = vset.pattern.permute.xlu0 1
    %662 = vperm.xlu0 %661, %v653
    %v663 = vpop.permute.xlu0 %662
    %v665 = vlaneseq
    %v666 = vshrl.u32 %v665, 7
    %v667 = vsub.s32 0, %v666
    %v668 = vrot.slane %v654, %v667
    %v669 = vmul.f32 %v658, %v668
    %v670 = vmul.f32 %v663, %v668
    %v671 = vand.u32 2147483647, %v669
    %vm672 = vcmp.le.f32.partialorder %v671, 0.7853982
    %vm673 = vcmp.lt.s32.totalorder %v669, 0
    %v674 = vand.u32 %v669, 2139095040
    %v675 = vshrl.u32 %v674, 23
    %v676 = vsub.s32 %v675, 127
    %v677 = vand.u32 2147483647, %v669
    %v678 = vand.u32 %v677, 8388607
    %v679 = vor.u32 %v678, 8388608
    %v680 = vsub.s32 0, %v679
    %v681 = vadd.s32 %v676, 1
    %vm682 = vcmp.gt.s32.totalorder %v681, 0
    %v683 = vsel %vm682, %v681, 0
    %v684 = vshrl.u32 %v683, 5
    %v685 = vand.u32 %v683, 31
    %v686 = vsub.s32 32, %v685
    %v687 = vshrl.u32 683565275, %v686
    %v688 = vshll.u32 683565275, %v685
    %v689 = vshrl.u32 2475754826, %v686
    %v690 = vor.u32 %v688, %v689
    %v691 = vshll.u32 2475754826, %v685
    %v692 = vshrl.u32 2131351028, %v686
    %v693 = vor.u32 %v691, %v692
    %v694 = vshll.u32 2131351028, %v685
    %v695 = vshrl.u32 2102212464, %v686
    %v696 = vor.u32 %v694, %v695
    %v697 = vshll.u32 2102212464, %v685
    %v698 = vshrl.u32 920167782, %v686
    %v699 = vor.u32 %v697, %v698
    %v700 = vshll.u32 920167782, %v685
    %v701 = vshrl.u32 1326507024, %v686
    %v702 = vor.u32 %v700, %v701
    %vm703 = vcmp.lt.s32.totalorder %v684, 1
    %vm704 = vcmp.lt.s32.totalorder %v684, 2
    %vm705 = vcmp.lt.s32.totalorder %v684, 3
    %vm706 = vcmp.lt.s32.totalorder %v684, 4
    %v707 = vsel %vm703, %v687, %v690
    %v708 = vsel %vm706, %v696, 2102212464
    %v709 = vsel %vm705, %v693, %v708
    %v710 = vsel %vm704, %v707, %v709
    %v711 = vsel %vm703, %v690, %v693
    %v712 = vsel %vm706, %v699, 920167782
    %v713 = vsel %vm705, %v696, %v712
    %v714 = vsel %vm704, %v711, %v713
    %v715 = vsel %vm703, %v693, %v696
    %v716 = vsel %vm706, %v702, 1326507024
    %v717 = vsel %vm705, %v699, %v716
    %v718 = vsel %vm704, %v715, %v717
    %v719 = vshll.u32 %v679, 8
    %v720 = vmul.u32.u64.compose %v719, %v718
    %v721 = vextract.low.u32 %v720
    %v722 = vextract.high.u32 %v720
    %v723 = vmul.u32.u64.compose %v719, %v714
    %v724 = vextract.low.u32 %v723
    %v725 = vextract.high.u32 %v723
    %v726 = vmul.u32 %v719, %v710
    %v727 = vadd.s32 %v722, %v724
    %vm728 = vc.u32 %v722, %v724
    %v729 = vadd.s32 %v725, 1
    %v730 = vsel %vm728, %v729, %v725
    %v731 = vadd.s32 %v726, %v730
    %v732 = vadd.s32 %v731, 536870912
    %v733 = vshrl.u32 %v732, 30
    %v734 = vshll.u32 %v733, 30
    %v735 = vsub.s32 %v731, %v734
    %vm736 = vcmp.lt.s32.totalorder %v735, 0
    %v737 = vsub.s32 0, %v735
    %v738 = vsel %vm736, %v737, %v735
    %v739 = vclz %v738
    %v740 = vsub.s32 %v739, 2
    %vm741 = vcmp.gt.s32.totalorder 0, %v740
    %v742 = vsel %vm741, 0, %v740
    %v743 = vsub.s32 32, %v742
    %v744 = vshll.u32 %v735, %v742
    %v745 = vshrl.u32 %v727, %v743
    %v746 = vor.u32 %v744, %v745
    %v747 = vsub.s32 4294967266, %v742
    %v748 = vadd.s32 %v747, 127
    %v749 = vshll.u32 %v748, 23
    %v750 = vor.u32 4788187, %v749
    %v751 = vand.u32 2147483647, %v750
    %v753 = vcvt.s32.f32 %v746
    %v754 = vmul.f32 %v753, %v751
    %v755 = vxor.u32 %v754, 2147483648
    %v756 = vsel %vm673, %v755, %v754
    %v757 = vsub.s32 4, %v733
    %v758 = vsel %vm673, %v757, %v733
    %v759 = vsel %vm672, %v669, %v756
    %v760 = vsel %vm672, 0, %v758
    %v761 = vcosq.f32.pop %v759
    %v762 = vsinq.f32.pop %v759
    %vm763 = vweird.f32 %v669
    %v764 = vand.u32 %v760, 3
    %vm765 = vcmp.lt.s32.totalorder %v764, 2
    %vm766 = vcmp.eq.s32.totalorder %v764, 0
    %v767 = vxor.u32 %v762, 2147483648
    %v768 = vsel %vm766, %v761, %v767
    %vm769 = vcmp.eq.s32.totalorder %v764, 2
    %v770 = vxor.u32 %v761, 2147483648
    %v771 = vsel %vm769, %v770, %v762
    %v772 = vsel %vm765, %v768, %v771
    %v773 = vsel %vm763, nan, %v772
    %v774 = vand.u32 2147483647, %v670
    %vm775 = vcmp.le.f32.partialorder %v774, 0.7853982
    %vm776 = vcmp.lt.s32.totalorder %v670, 0
    %v777 = vand.u32 %v670, 2139095040
    %v778 = vshrl.u32 %v777, 23
    %v779 = vsub.s32 %v778, 127
    %v780 = vand.u32 2147483647, %v670
    %v781 = vand.u32 %v780, 8388607
    %v782 = vor.u32 %v781, 8388608
    %v783 = vsub.s32 0, %v782
    %v784 = vadd.s32 %v779, 1
    %vm785 = vcmp.gt.s32.totalorder %v784, 0
    %v786 = vsel %vm785, %v784, 0
    %v787 = vshrl.u32 %v786, 5
    %v788 = vand.u32 %v786, 31
    %v789 = vsub.s32 32, %v788
    %v790 = vshrl.u32 683565275, %v789
    %v791 = vshll.u32 683565275, %v788
    %v792 = vshrl.u32 2475754826, %v789
    %v793 = vor.u32 %v791, %v792
    %v794 = vshll.u32 2475754826, %v788
    %v795 = vshrl.u32 2131351028, %v789
    %v796 = vor.u32 %v794, %v795
    %v797 = vshll.u32 2131351028, %v788
    %v798 = vshrl.u32 2102212464, %v789
    %v799 = vor.u32 %v797, %v798
    %v800 = vshll.u32 2102212464, %v788
    %v801 = vshrl.u32 920167782, %v789
    %v802 = vor.u32 %v800, %v801
    %v803 = vshll.u32 920167782, %v788
    %v804 = vshrl.u32 1326507024, %v789
    %v805 = vor.u32 %v803, %v804
    %vm806 = vcmp.lt.s32.totalorder %v787, 1
    %vm807 = vcmp.lt.s32.totalorder %v787, 2
    %vm808 = vcmp.lt.s32.totalorder %v787, 3
    %vm809 = vcmp.lt.s32.totalorder %v787, 4
    %v810 = vsel %vm806, %v790, %v793
    %v811 = vsel %vm809, %v799, 2102212464
    %v812 = vsel %vm808, %v796, %v811
    %v813 = vsel %vm807, %v810, %v812
    %v814 = vsel %vm806, %v793, %v796
    %v815 = vsel %vm809, %v802, 920167782
    %v816 = vsel %vm808, %v799, %v815
    %v817 = vsel %vm807, %v814, %v816
    %v818 = vsel %vm806, %v796, %v799
    %v819 = vsel %vm809, %v805, 1326507024
    %v820 = vsel %vm808, %v802, %v819
    %v821 = vsel %vm807, %v818, %v820
    %v822 = vshll.u32 %v782, 8
    %v823 = vmul.u32.u64.compose %v822, %v821
    %v824 = vextract.low.u32 %v823
    %v825 = vextract.high.u32 %v823
    %v826 = vmul.u32.u64.compose %v822, %v817
    %v827 = vextract.low.u32 %v826
    %v828 = vextract.high.u32 %v826
    %v829 = vmul.u32 %v822, %v813
    %v830 = vadd.s32 %v825, %v827
    %vm831 = vc.u32 %v825, %v827
    %v832 = vadd.s32 %v828, 1
    %v833 = vsel %vm831, %v832, %v828
    %v834 = vadd.s32 %v829, %v833
    %v835 = vadd.s32 %v834, 536870912
    %v836 = vshrl.u32 %v835, 30
    %v837 = vshll.u32 %v836, 30
    %v838 = vsub.s32 %v834, %v837
    %vm839 = vcmp.lt.s32.totalorder %v838, 0
    %v840 = vsub.s32 0, %v838
    %v841 = vsel %vm839, %v840, %v838
    %v842 = vclz %v841
    %v843 = vsub.s32 %v842, 2
    %vm844 = vcmp.gt.s32.totalorder 0, %v843
    %v845 = vsel %vm844, 0, %v843
    %v846 = vsub.s32 32, %v845
    %v847 = vshll.u32 %v838, %v845
    %v848 = vshrl.u32 %v830, %v846
    %v849 = vor.u32 %v847, %v848
    %v850 = vsub.s32 4294967266, %v845
    %v851 = vadd.s32 %v850, 127
    %v852 = vshll.u32 %v851, 23
    %v853 = vor.u32 4788187, %v852
    %v854 = vand.u32 2147483647, %v853
    %v856 = vcvt.s32.f32 %v849
    %v857 = vmul.f32 %v856, %v854
    %v858 = vxor.u32 %v857, 2147483648
    %v859 = vsel %vm776, %v858, %v857
    %v860 = vsub.s32 4, %v836
    %v861 = vsel %vm776, %v860, %v836
    %v862 = vsel %vm775, %v670, %v859
    %v863 = vsel %vm775, 0, %v861
    %v864 = vcosq.f32.pop %v862
    %v865 = vsinq.f32.pop %v862
    %vm866 = vweird.f32 %v670
    %v867 = vand.u32 %v863, 3
    %vm868 = vcmp.lt.s32.totalorder %v867, 2
    %vm869 = vcmp.eq.s32.totalorder %v867, 0
    %v870 = vxor.u32 %v865, 2147483648
    %v871 = vsel %vm869, %v864, %v870
    %vm872 = vcmp.eq.s32.totalorder %v867, 2
    %v873 = vxor.u32 %v864, 2147483648
    %v874 = vsel %vm872, %v873, %v865
    %v875 = vsel %vm868, %v871, %v874
    %v876 = vsel %vm866, nan, %v875
    %v877 = vld [vmem:[%s3] sm:$0xff]
    %v878 = vand.u32 2147483647, %v669
    %vm879 = vcmp.le.f32.partialorder %v878, 0.7853982
    %vm880 = vcmp.lt.s32.totalorder %v669, 0
    %v881 = vand.u32 %v669, 2139095040
    %v882 = vshrl.u32 %v881, 23
    %v883 = vsub.s32 %v882, 127
    %v884 = vand.u32 2147483647, %v669
    %v885 = vand.u32 %v884, 8388607
    %v886 = vor.u32 %v885, 8388608
    %v887 = vsub.s32 0, %v886
    %v888 = vadd.s32 %v883, 1
    %vm889 = vcmp.gt.s32.totalorder %v888, 0
    %v890 = vsel %vm889, %v888, 0
    %v891 = vshrl.u32 %v890, 5
    %v892 = vand.u32 %v890, 31
    %v893 = vsub.s32 32, %v892
    %v894 = vshrl.u32 683565275, %v893
    %v895 = vshll.u32 683565275, %v892
    %v896 = vshrl.u32 2475754826, %v893
    %v897 = vor.u32 %v895, %v896
    %v898 = vshll.u32 2475754826, %v892
    %v899 = vshrl.u32 2131351028, %v893
    %v900 = vor.u32 %v898, %v899
    %v901 = vshll.u32 2131351028, %v892
    %v902 = vshrl.u32 2102212464, %v893
    %v903 = vor.u32 %v901, %v902
    %v904 = vshll.u32 2102212464, %v892
    %v905 = vshrl.u32 920167782, %v893
    %v906 = vor.u32 %v904, %v905
    %v907 = vshll.u32 920167782, %v892
    %v908 = vshrl.u32 1326507024, %v893
    %v909 = vor.u32 %v907, %v908
    %vm910 = vcmp.lt.s32.totalorder %v891, 1
    %vm911 = vcmp.lt.s32.totalorder %v891, 2
    %vm912 = vcmp.lt.s32.totalorder %v891, 3
    %vm913 = vcmp.lt.s32.totalorder %v891, 4
    %v914 = vsel %vm910, %v894, %v897
    %v915 = vsel %vm913, %v903, 2102212464
    %v916 = vsel %vm912, %v900, %v915
    %v917 = vsel %vm911, %v914, %v916
    %v918 = vsel %vm910, %v897, %v900
    %v919 = vsel %vm913, %v906, 920167782
    %v920 = vsel %vm912, %v903, %v919
    %v921 = vsel %vm911, %v918, %v920
    %v922 = vsel %vm910, %v900, %v903
    %v923 = vsel %vm913, %v909, 1326507024
    %v924 = vsel %vm912, %v906, %v923
    %v925 = vsel %vm911, %v922, %v924
    %v926 = vshll.u32 %v886, 8
    %v927 = vmul.u32.u64.compose %v926, %v925
    %v928 = vextract.low.u32 %v927
    %v929 = vextract.high.u32 %v927
    %v930 = vmul.u32.u64.compose %v926, %v921
    %v931 = vextract.low.u32 %v930
    %v932 = vextract.high.u32 %v930
    %v933 = vmul.u32 %v926, %v917
    %v934 = vadd.s32 %v929, %v931
    %vm935 = vc.u32 %v929, %v931
    %v936 = vadd.s32 %v932, 1
    %v937 = vsel %vm935, %v936, %v932
    %v938 = vadd.s32 %v933, %v937
    %v939 = vadd.s32 %v938, 536870912
    %v940 = vshrl.u32 %v939, 30
    %v941 = vshll.u32 %v940, 30
    %v942 = vsub.s32 %v938, %v941
    %vm943 = vcmp.lt.s32.totalorder %v942, 0
    %v944 = vsub.s32 0, %v942
    %v945 = vsel %vm943, %v944, %v942
    %v946 = vclz %v945
    %v947 = vsub.s32 %v946, 2
    %vm948 = vcmp.gt.s32.totalorder 0, %v947
    %v949 = vsel %vm948, 0, %v947
    %v950 = vsub.s32 32, %v949
    %v951 = vshll.u32 %v942, %v949
    %v952 = vshrl.u32 %v934, %v950
    %v953 = vor.u32 %v951, %v952
    %v954 = vsub.s32 4294967266, %v949
    %v955 = vadd.s32 %v954, 127
    %v956 = vshll.u32 %v955, 23
    %v957 = vor.u32 4788187, %v956
    %v958 = vand.u32 2147483647, %v957
    %v960 = vcvt.s32.f32 %v953
    %v961 = vmul.f32 %v960, %v958
    %v962 = vxor.u32 %v961, 2147483648
    %v963 = vsel %vm880, %v962, %v961
    %v964 = vsub.s32 4, %v940
    %v965 = vsel %vm880, %v964, %v940
    %v966 = vsel %vm879, %v669, %v963
    %v967 = vsel %vm879, 0, %v965
    %v968 = vcosq.f32.pop %v966
    %v969 = vsinq.f32.pop %v966
    %vm970 = vweird.f32 %v669
    %v971 = vadd.s32 %v967, 3
    %v972 = vand.u32 %v971, 3
    %vm973 = vcmp.lt.s32.totalorder %v972, 2
    %vm974 = vcmp.eq.s32.totalorder %v972, 0
    %v975 = vxor.u32 %v969, 2147483648
    %v976 = vsel %vm974, %v968, %v975
    %vm977 = vcmp.eq.s32.totalorder %v972, 2
    %v978 = vxor.u32 %v968, 2147483648
    %v979 = vsel %vm977, %v978, %v969
    %v980 = vsel %vm973, %v976, %v979
    %v981 = vsel %vm970, nan, %v980
    %v982 = vand.u32 2147483647, %v670
    %vm983 = vcmp.le.f32.partialorder %v982, 0.7853982
    %vm984 = vcmp.lt.s32.totalorder %v670, 0
    %v985 = vand.u32 %v670, 2139095040
    %v986 = vshrl.u32 %v985, 23
    %v987 = vsub.s32 %v986, 127
    %v988 = vand.u32 2147483647, %v670
    %v989 = vand.u32 %v988, 8388607
    %v990 = vor.u32 %v989, 8388608
    %v991 = vsub.s32 0, %v990
    %v992 = vadd.s32 %v987, 1
    %vm993 = vcmp.gt.s32.totalorder %v992, 0
    %v994 = vsel %vm993, %v992, 0
    %v995 = vshrl.u32 %v994, 5
    %v996 = vand.u32 %v994, 31
    %v997 = vsub.s32 32, %v996
    %v998 = vshrl.u32 683565275, %v997
    %v999 = vshll.u32 683565275, %v996
    %v1000 = vshrl.u32 2475754826, %v997
    %v1001 = vor.u32 %v999, %v1000
    %v1002 = vshll.u32 2475754826, %v996
    %v1003 = vshrl.u32 2131351028, %v997
    %v1004 = vor.u32 %v1002, %v1003
    %v1005 = vshll.u32 2131351028, %v996
    %v1006 = vshrl.u32 2102212464, %v997
    %v1007 = vor.u32 %v1005, %v1006
    %v1008 = vshll.u32 2102212464, %v996
    %v1009 = vshrl.u32 920167782, %v997
    %v1010 = vor.u32 %v1008, %v1009
    %v1011 = vshll.u32 920167782, %v996
    %v1012 = vshrl.u32 1326507024, %v997
    %v1013 = vor.u32 %v1011, %v1012
    %vm1014 = vcmp.lt.s32.totalorder %v995, 1
    %vm1015 = vcmp.lt.s32.totalorder %v995, 2
    %vm1016 = vcmp.lt.s32.totalorder %v995, 3
    %vm1017 = vcmp.lt.s32.totalorder %v995, 4
    %v1018 = vsel %vm1014, %v998, %v1001
    %v1019 = vsel %vm1017, %v1007, 2102212464
    %v1020 = vsel %vm1016, %v1004, %v1019
    %v1021 = vsel %vm1015, %v1018, %v1020
    %v1022 = vsel %vm1014, %v1001, %v1004
    %v1023 = vsel %vm1017, %v1010, 920167782
    %v1024 = vsel %vm1016, %v1007, %v1023
    %v1025 = vsel %vm1015, %v1022, %v1024
    %v1026 = vsel %vm1014, %v1004, %v1007
    %v1027 = vsel %vm1017, %v1013, 1326507024
    %v1028 = vsel %vm1016, %v1010, %v1027
    %v1029 = vsel %vm1015, %v1026, %v1028
    %v1030 = vshll.u32 %v990, 8
    %v1031 = vmul.u32.u64.compose %v1030, %v1029
    %v1032 = vextract.low.u32 %v1031
    %v1033 = vextract.high.u32 %v1031
    %v1034 = vmul.u32.u64.compose %v1030, %v1025
    %v1035 = vextract.low.u32 %v1034
    %v1036 = vextract.high.u32 %v1034
    %v1037 = vmul.u32 %v1030, %v1021
    %v1038 = vadd.s32 %v1033, %v1035
    %vm1039 = vc.u32 %v1033, %v1035
    %v1040 = vadd.s32 %v1036, 1
    %v1041 = vsel %vm1039, %v1040, %v1036
    %v1042 = vadd.s32 %v1037, %v1041
    %v1043 = vadd.s32 %v1042, 536870912
    %v1044 = vshrl.u32 %v1043, 30
    %v1045 = vshll.u32 %v1044, 30
    %v1046 = vsub.s32 %v1042, %v1045
    %vm1047 = vcmp.lt.s32.totalorder %v1046, 0
    %v1048 = vsub.s32 0, %v1046
    %v1049 = vsel %vm1047, %v1048, %v1046
    %v1050 = vclz %v1049
    %v1051 = vsub.s32 %v1050, 2
    %vm1052 = vcmp.gt.s32.totalorder 0, %v1051
    %v1053 = vsel %vm1052, 0, %v1051
    %v1054 = vsub.s32 32, %v1053
    %v1055 = vshll.u32 %v1046, %v1053
    %v1056 = vshrl.u32 %v1038, %v1054
    %v1057 = vor.u32 %v1055, %v1056
    %v1058 = vsub.s32 4294967266, %v1053
    %v1059 = vadd.s32 %v1058, 127
    %v1060 = vshll.u32 %v1059, 23
    %v1061 = vor.u32 4788187, %v1060
    %v1062 = vand.u32 2147483647, %v1061
    %v1064 = vcvt.s32.f32 %v1057
    %v1065 = vmul.f32 %v1064, %v1062
    %v1066 = vxor.u32 %v1065, 2147483648
    %v1067 = vsel %vm984, %v1066, %v1065
    %v1068 = vsub.s32 4, %v1044
    %v1069 = vsel %vm984, %v1068, %v1044
    %v1070 = vsel %vm983, %v670, %v1067
    %v1071 = vsel %vm983, 0, %v1069
    %v1072 = vcosq.f32.pop %v1070
    %v1073 = vsinq.f32.pop %v1070
    %vm1074 = vweird.f32 %v670
    %v1075 = vadd.s32 %v1071, 3
    %v1076 = vand.u32 %v1075, 3
    %vm1077 = vcmp.lt.s32.totalorder %v1076, 2
    %vm1078 = vcmp.eq.s32.totalorder %v1076, 0
    %v1079 = vxor.u32 %v1073, 2147483648
    %v1080 = vsel %vm1078, %v1072, %v1079
    %vm1081 = vcmp.eq.s32.totalorder %v1076, 2
    %v1082 = vxor.u32 %v1072, 2147483648
    %v1083 = vsel %vm1081, %v1082, %v1073
    %v1084 = vsel %vm1077, %v1080, %v1083
    %v1085 = vsel %vm1074, nan, %v1084
    %v1086 = vld [vmem:[%s4] sm:$0xff]
    %v1088 = vsel %vm474, %v981, 0
    %v1091 = vsel %vm474, %v1085, 0
    %1093 = vmatprep.subr.mxu0 0.0
    %1094 = vmatpush1.msra.mxu0 %v1086
    %1095 = vmatprep.subr.mxu0 0.0
    %1096 = vmatpush1.msra.mxu0 0.0
    %1097 = vmatprep.subr.mxu0 0.0
    %1098 = vmatpush1.msra.mxu0 0.0
    %1099 = vmatprep.subr.mxu0 0.0
    %1100 = vmatpush1.msra.mxu0 0.0
    %1101 = vmatprep.subr.mxu0 0.0
    %1102 = vmatpush1.msra.mxu0 0.0
    %1103 = vmatprep.subr.mxu0 0.0
    %1104 = vmatpush1.msra.mxu0 0.0
    %1105 = vmatprep.subr.mxu0 0.0
    %1106 = vmatpush1.msra.mxu0 0.0
    %1107 = vmatprep.subr.mxu0 0.0
    %1108 = vmatpush1.msra.mxu0 0.0
    %1109 = vmatprep.subr.mxu0 0.0
    %1110 = vmatpush1.msra.mxu0 0.0
    %1111 = vmatprep.subr.mxu0 0.0
    %1112 = vmatpush1.msra.mxu0 0.0
    %1113 = vmatprep.subr.mxu0 0.0
    %1114 = vmatpush1.msra.mxu0 0.0
    %1115 = vmatprep.subr.mxu0 0.0
    %1116 = vmatpush1.msra.mxu0 0.0
    %1117 = vmatprep.subr.mxu0 0.0
    %1118 = vmatpush1.msra.mxu0 0.0
    %1119 = vmatprep.subr.mxu0 0.0
    %1120 = vmatpush1.msra.mxu0 0.0
    %1121 = vmatprep.subr.mxu0 0.0
    %1122 = vmatpush1.msra.mxu0 0.0
    %1123 = vmatprep.subr.mxu0 0.0
    %1124 = vmatpush1.msra.mxu0 0.0
    %1125 = vmatprep.subr.mxu0 0.0
    %1126 = vmatpush1.msra.mxu0 0.0
    %1127 = vmatprep.subr.mxu0 0.0
    %1128 = vmatpush1.msra.mxu0 0.0
    %1129 = vmatprep.subr.mxu0 0.0
    %1130 = vmatpush1.msra.mxu0 0.0
    %1131 = vmatprep.subr.mxu0 0.0
    %1132 = vmatpush1.msra.mxu0 0.0
    %1133 = vmatprep.subr.mxu0 0.0
    %1134 = vmatpush1.msra.mxu0 0.0
    %1135 = vmatprep.subr.mxu0 0.0
    %1136 = vmatpush1.msra.mxu0 0.0
    %1137 = vmatprep.subr.mxu0 0.0
    %1138 = vmatpush1.msra.mxu0 0.0
    %1139 = vmatprep.subr.mxu0 0.0
    %1140 = vmatpush1.msra.mxu0 0.0
    %1141 = vmatprep.subr.mxu0 0.0
    %1142 = vmatpush1.msra.mxu0 0.0
    %1143 = vmatprep.subr.mxu0 0.0
    %1144 = vmatpush1.msra.mxu0 0.0
    %1145 = vmatprep.subr.mxu0 0.0
    %1146 = vmatpush1.msra.mxu0 0.0
    %1147 = vmatprep.subr.mxu0 0.0
    %1148 = vmatpush1.msra.mxu0 0.0
    %1149 = vmatprep.subr.mxu0 0.0
    %1150 = vmatpush1.msra.mxu0 0.0
    %1151 = vmatprep.subr.mxu0 0.0
    %1152 = vmatpush1.msra.mxu0 0.0
    %1153 = vmatprep.subr.mxu0 0.0
    %1154 = vmatpush1.msra.mxu0 0.0
    %1155 = vmatprep.subr.mxu0 0.0
    %1156 = vmatpush1.msra.mxu0 0.0
    %1157 = vmatprep.mubr.f32.mxu0 0.0
    %1158 = vmatmul.mubr.f32.gmra.mrb[0].mxu0 %v1088
    %v1159 = vpop.f32.mrb[0].mxu0
    %v1160 = vadd.f32 0.0, %v1159
    %v1161 = vpop.f32.mrb[0].mxu0
    %1162 = vmatprep.mubr.f32.mxu0 0.0
    %1163 = vmatmul.mubr.f32.gmra.mrb[0].mxu0 %v1091
    %v1164 = vpop.f32.mrb[0].mxu0
    %v1165 = vadd.f32 0.0, %v1164
    %v1166 = vpop.f32.mrb[0].mxu0
    %1167 = vdwg.mxu0
    %v1169 = vsel %vm474, %v773, 0
    %v1172 = vsel %vm474, %v876, 0
    %1174 = vmatprep.subr.mxu0 0.0
    %1175 = vmatpush1.msra.mxu0 %v877
    %1176 = vmatprep.subr.mxu0 0.0
    %1177 = vmatpush1.msra.mxu0 0.0
    %1178 = vmatprep.subr.mxu0 0.0
    %1179 = vmatpush1.msra.mxu0 0.0
    %1180 = vmatprep.subr.mxu0 0.0
    %1181 = vmatpush1.msra.mxu0 0.0
    %1182 = vmatprep.subr.mxu0 0.0
    %1183 = vmatpush1.msra.mxu0 0.0
    %1184 = vmatprep.subr.mxu0 0.0
    %1185 = vmatpush1.msra.mxu0 0.0
    %1186 = vmatprep.subr.mxu0 0.0
    %1187 = vmatpush1.msra.mxu0 0.0
    %1188 = vmatprep.subr.mxu0 0.0
    %1189 = vmatpush1.msra.mxu0 0.0
    %1190 = vmatprep.subr.mxu0 0.0
    %1191 = vmatpush1.msra.mxu0 0.0
    %1192 = vmatprep.subr.mxu0 0.0
    %1193 = vmatpush1.msra.mxu0 0.0
    %1194 = vmatprep.subr.mxu0 0.0
    %1195 = vmatpush1.msra.mxu0 0.0
    %1196 = vmatprep.subr.mxu0 0.0
    %1197 = vmatpush1.msra.mxu0 0.0
    %1198 = vmatprep.subr.mxu0 0.0
    %1199 = vmatpush1.msra.mxu0 0.0
    %1200 = vmatprep.subr.mxu0 0.0
    %1201 = vmatpush1.msra.mxu0 0.0
    %1202 = vmatprep.subr.mxu0 0.0
    %1203 = vmatpush1.msra.mxu0 0.0
    %1204 = vmatprep.subr.mxu0 0.0
    %1205 = vmatpush1.msra.mxu0 0.0
    %1206 = vmatprep.subr.mxu0 0.0
    %1207 = vmatpush1.msra.mxu0 0.0
    %1208 = vmatprep.subr.mxu0 0.0
    %1209 = vmatpush1.msra.mxu0 0.0
    %1210 = vmatprep.subr.mxu0 0.0
    %1211 = vmatpush1.msra.mxu0 0.0
    %1212 = vmatprep.subr.mxu0 0.0
    %1213 = vmatpush1.msra.mxu0 0.0
    %1214 = vmatprep.subr.mxu0 0.0
    %1215 = vmatpush1.msra.mxu0 0.0
    %1216 = vmatprep.subr.mxu0 0.0
    %1217 = vmatpush1.msra.mxu0 0.0
    %1218 = vmatprep.subr.mxu0 0.0
    %1219 = vmatpush1.msra.mxu0 0.0
    %1220 = vmatprep.subr.mxu0 0.0
    %1221 = vmatpush1.msra.mxu0 0.0
    %1222 = vmatprep.subr.mxu0 0.0
    %1223 = vmatpush1.msra.mxu0 0.0
    %1224 = vmatprep.subr.mxu0 0.0
    %1225 = vmatpush1.msra.mxu0 0.0
    %1226 = vmatprep.subr.mxu0 0.0
    %1227 = vmatpush1.msra.mxu0 0.0
    %1228 = vmatprep.subr.mxu0 0.0
    %1229 = vmatpush1.msra.mxu0 0.0
    %1230 = vmatprep.subr.mxu0 0.0
    %1231 = vmatpush1.msra.mxu0 0.0
    %1232 = vmatprep.subr.mxu0 0.0
    %1233 = vmatpush1.msra.mxu0 0.0
    %1234 = vmatprep.subr.mxu0 0.0
    %1235 = vmatpush1.msra.mxu0 0.0
    %1236 = vmatprep.subr.mxu0 0.0
    %1237 = vmatpush1.msra.mxu0 0.0
    %1238 = vmatprep.mubr.f32.mxu0 0.0
    %1239 = vmatmul.mubr.f32.gmra.mrb[0].mxu0 %v1169
    %v1240 = vpop.f32.mrb[0].mxu0
    %v1241 = vadd.f32 %v1160, %v1240
    %v1242 = vpop.f32.mrb[0].mxu0
    %1243 = vmatprep.mubr.f32.mxu0 0.0
    %1244 = vmatmul.mubr.f32.gmra.mrb[0].mxu0 %v1172
    %v1245 = vpop.f32.mrb[0].mxu0
    %v1246 = vadd.f32 %v1165, %v1245
    %v1247 = vpop.f32.mrb[0].mxu0
    %1248 = vdwg.mxu0
    %v1249 = vadd.f32 %v1241, %v641
    %v1250 = vadd.f32 %v1246, %v641
    %v1251 = vmax.f32 %v1249, 0.0
    %v1252 = vmax.f32 %v1250, 0.0
    %v1253 = vpack.c.bf16 %v1252, %v1251
    %1255 = vrot.lane.b32.xlu0 %v1253, 16
    %v1256 = vpop.permute.xlu0 %1255
    %vm1258 = vcmask 261248
    %1259 = vst.msk [vmem:[#allocation2] sm:$0xff] %vm1258, %v1256
    %v1260 = vld [vmem:[%s0] sm:$0xff]
    %v1261 = vld [vmem:[%s0 + $0x8] sm:$0xff]
    %v1262 = vmul.f32 %v1260, 6.2831855
    %v1263 = vmul.f32 %v1261, 6.2831855
    %v1264 = vld [vmem:[%s2 + $0x2] sm:$0x1]
    %1266 = vset.pattern.permute.xlu0 2
    %1267 = vperm.xlu0 %1266, %v1262
    %v1268 = vpop.permute.xlu0 %1267
    %1271 = vset.pattern.permute.xlu0 2
    %1272 = vperm.xlu0 %1271, %v1263
    %v1273 = vpop.permute.xlu0 %1272
    %v1275 = vlaneseq
    %v1276 = vshrl.u32 %v1275, 7
    %v1277 = vsub.s32 0, %v1276
    %v1278 = vrot.slane %v1264, %v1277
    %v1279 = vmul.f32 %v1268, %v1278
    %v1280 = vmul.f32 %v1273, %v1278
    %v1281 = vand.u32 2147483647, %v1279
    %vm1282 = vcmp.le.f32.partialorder %v1281, 0.7853982
    %vm1283 = vcmp.lt.s32.totalorder %v1279, 0
    %v1284 = vand.u32 %v1279, 2139095040
    %v1285 = vshrl.u32 %v1284, 23
    %v1286 = vsub.s32 %v1285, 127
    %v1287 = vand.u32 2147483647, %v1279
    %v1288 = vand.u32 %v1287, 8388607
    %v1289 = vor.u32 %v1288, 8388608
    %v1290 = vsub.s32 0, %v1289
    %v1291 = vadd.s32 %v1286, 1
    %vm1292 = vcmp.gt.s32.totalorder %v1291, 0
    %v1293 = vsel %vm1292, %v1291, 0
    %v1294 = vshrl.u32 %v1293, 5
    %v1295 = vand.u32 %v1293, 31
    %v1296 = vsub.s32 32, %v1295
    %v1297 = vshrl.u32 683565275, %v1296
    %v1298 = vshll.u32 683565275, %v1295
    %v1299 = vshrl.u32 2475754826, %v1296
    %v1300 = vor.u32 %v1298, %v1299
    %v1301 = vshll.u32 2475754826, %v1295
    %v1302 = vshrl.u32 2131351028, %v1296
    %v1303 = vor.u32 %v1301, %v1302
    %v1304 = vshll.u32 2131351028, %v1295
    %v1305 = vshrl.u32 2102212464, %v1296
    %v1306 = vor.u32 %v1304, %v1305
    %v1307 = vshll.u32 2102212464, %v1295
    %v1308 = vshrl.u32 920167782, %v1296
    %v1309 = vor.u32 %v1307, %v1308
    %v1310 = vshll.u32 920167782, %v1295
    %v1311 = vshrl.u32 1326507024, %v1296
    %v1312 = vor.u32 %v1310, %v1311
    %vm1313 = vcmp.lt.s32.totalorder %v1294, 1
    %vm1314 = vcmp.lt.s32.totalorder %v1294, 2
    %vm1315 = vcmp.lt.s32.totalorder %v1294, 3
    %vm1316 = vcmp.lt.s32.totalorder %v1294, 4
    %v1317 = vsel %vm1313, %v1297, %v1300
    %v1318 = vsel %vm1316, %v1306, 2102212464
    %v1319 = vsel %vm1315, %v1303, %v1318
    %v1320 = vsel %vm1314, %v1317, %v1319
    %v1321 = vsel %vm1313, %v1300, %v1303
    %v1322 = vsel %vm1316, %v1309, 920167782
    %v1323 = vsel %vm1315, %v1306, %v1322
    %v1324 = vsel %vm1314, %v1321, %v1323
    %v1325 = vsel %vm1313, %v1303, %v1306
    %v1326 = vsel %vm1316, %v1312, 1326507024
    %v1327 = vsel %vm1315, %v1309, %v1326
    %v1328 = vsel %vm1314, %v1325, %v1327
    %v1329 = vshll.u32 %v1289, 8
    %v1330 = vmul.u32.u64.compose %v1329, %v1328
    %v1331 = vextract.low.u32 %v1330
    %v1332 = vextract.high.u32 %v1330
    %v1333 = vmul.u32.u64.compose %v1329, %v1324
    %v1334 = vextract.low.u32 %v1333
    %v1335 = vextract.high.u32 %v1333
    %v1336 = vmul.u32 %v1329, %v1320
    %v1337 = vadd.s32 %v1332, %v1334
    %vm1338 = vc.u32 %v1332, %v1334
    %v1339 = vadd.s32 %v1335, 1
    %v1340 = vsel %vm1338, %v1339, %v1335
    %v1341 = vadd.s32 %v1336, %v1340
    %v1342 = vadd.s32 %v1341, 536870912
    %v1343 = vshrl.u32 %v1342, 30
    %v1344 = vshll.u32 %v1343, 30
    %v1345 = vsub.s32 %v1341, %v1344
    %vm1346 = vcmp.lt.s32.totalorder %v1345, 0
    %v1347 = vsub.s32 0, %v1345
    %v1348 = vsel %vm1346, %v1347, %v1345
    %v1349 = vclz %v1348
    %v1350 = vsub.s32 %v1349, 2
    %vm1351 = vcmp.gt.s32.totalorder 0, %v1350
    %v1352 = vsel %vm1351, 0, %v1350
    %v1353 = vsub.s32 32, %v1352
    %v1354 = vshll.u32 %v1345, %v1352
    %v1355 = vshrl.u32 %v1337, %v1353
    %v1356 = vor.u32 %v1354, %v1355
    %v1357 = vsub.s32 4294967266, %v1352
    %v1358 = vadd.s32 %v1357, 127
    %v1359 = vshll.u32 %v1358, 23
    %v1360 = vor.u32 4788187, %v1359
    %v1361 = vand.u32 2147483647, %v1360
    %v1363 = vcvt.s32.f32 %v1356
    %v1364 = vmul.f32 %v1363, %v1361
    %v1365 = vxor.u32 %v1364, 2147483648
    %v1366 = vsel %vm1283, %v1365, %v1364
    %v1367 = vsub.s32 4, %v1343
    %v1368 = vsel %vm1283, %v1367, %v1343
    %v1369 = vsel %vm1282, %v1279, %v1366
    %v1370 = vsel %vm1282, 0, %v1368
    %v1371 = vcosq.f32.pop %v1369
    %v1372 = vsinq.f32.pop %v1369
    %vm1373 = vweird.f32 %v1279
    %v1374 = vand.u32 %v1370, 3
    %vm1375 = vcmp.lt.s32.totalorder %v1374, 2
    %vm1376 = vcmp.eq.s32.totalorder %v1374, 0
    %v1377 = vxor.u32 %v1372, 2147483648
    %v1378 = vsel %vm1376, %v1371, %v1377
    %vm1379 = vcmp.eq.s32.totalorder %v1374, 2
    %v1380 = vxor.u32 %v1371, 2147483648
    %v1381 = vsel %vm1379, %v1380, %v1372
    %v1382 = vsel %vm1375, %v1378, %v1381
    %v1383 = vsel %vm1373, nan, %v1382
    %v1384 = vand.u32 2147483647, %v1280
    %vm1385 = vcmp.le.f32.partialorder %v1384, 0.7853982
    %vm1386 = vcmp.lt.s32.totalorder %v1280, 0
    %v1387 = vand.u32 %v1280, 2139095040
    %v1388 = vshrl.u32 %v1387, 23
    %v1389 = vsub.s32 %v1388, 127
    %v1390 = vand.u32 2147483647, %v1280
    %v1391 = vand.u32 %v1390, 8388607
    %v1392 = vor.u32 %v1391, 8388608
    %v1393 = vsub.s32 0, %v1392
    %v1394 = vadd.s32 %v1389, 1
    %vm1395 = vcmp.gt.s32.totalorder %v1394, 0
    %v1396 = vsel %vm1395, %v1394, 0
    %v1397 = vshrl.u32 %v1396, 5
    %v1398 = vand.u32 %v1396, 31
    %v1399 = vsub.s32 32, %v1398
    %v1400 = vshrl.u32 683565275, %v1399
    %v1401 = vshll.u32 683565275, %v1398
    %v1402 = vshrl.u32 2475754826, %v1399
    %v1403 = vor.u32 %v1401, %v1402
    %v1404 = vshll.u32 2475754826, %v1398
    %v1405 = vshrl.u32 2131351028, %v1399
    %v1406 = vor.u32 %v1404, %v1405
    %v1407 = vshll.u32 2131351028, %v1398
    %v1408 = vshrl.u32 2102212464, %v1399
    %v1409 = vor.u32 %v1407, %v1408
    %v1410 = vshll.u32 2102212464, %v1398
    %v1411 = vshrl.u32 920167782, %v1399
    %v1412 = vor.u32 %v1410, %v1411
    %v1413 = vshll.u32 920167782, %v1398
    %v1414 = vshrl.u32 1326507024, %v1399
    %v1415 = vor.u32 %v1413, %v1414
    %vm1416 = vcmp.lt.s32.totalorder %v1397, 1
    %vm1417 = vcmp.lt.s32.totalorder %v1397, 2
    %vm1418 = vcmp.lt.s32.totalorder %v1397, 3
    %vm1419 = vcmp.lt.s32.totalorder %v1397, 4
    %v1420 = vsel %vm1416, %v1400, %v1403
    %v1421 = vsel %vm1419, %v1409, 2102212464
    %v1422 = vsel %vm1418, %v1406, %v1421
    %v1423 = vsel %vm1417, %v1420, %v1422
    %v1424 = vsel %vm1416, %v1403, %v1406
    %v1425 = vsel %vm1419, %v1412, 920167782
    %v1426 = vsel %vm1418, %v1409, %v1425
    %v1427 = vsel %vm1417, %v1424, %v1426
    %v1428 = vsel %vm1416, %v1406, %v1409
    %v1429 = vsel %vm1419, %v1415, 1326507024
    %v1430 = vsel %vm1418, %v1412, %v1429
    %v1431 = vsel %vm1417, %v1428, %v1430
    %v1432 = vshll.u32 %v1392, 8
    %v1433 = vmul.u32.u64.compose %v1432, %v1431
    %v1434 = vextract.low.u32 %v1433
    %v1435 = vextract.high.u32 %v1433
    %v1436 = vmul.u32.u64.compose %v1432, %v1427
    %v1437 = vextract.low.u32 %v1436
    %v1438 = vextract.high.u32 %v1436
    %v1439 = vmul.u32 %v1432, %v1423
    %v1440 = vadd.s32 %v1435, %v1437
    %vm1441 = vc.u32 %v1435, %v1437
    %v1442 = vadd.s32 %v1438, 1
    %v1443 = vsel %vm1441, %v1442, %v1438
    %v1444 = vadd.s32 %v1439, %v1443
    %v1445 = vadd.s32 %v1444, 536870912
    %v1446 = vshrl.u32 %v1445, 30
    %v1447 = vshll.u32 %v1446, 30
    %v1448 = vsub.s32 %v1444, %v1447
    %vm1449 = vcmp.lt.s32.totalorder %v1448, 0
    %v1450 = vsub.s32 0, %v1448
    %v1451 = vsel %vm1449, %v1450, %v1448
    %v1452 = vclz %v1451
    %v1453 = vsub.s32 %v1452, 2
    %vm1454 = vcmp.gt.s32.totalorder 0, %v1453
    %v1455 = vsel %vm1454, 0, %v1453
    %v1456 = vsub.s32 32, %v1455
    %v1457 = vshll.u32 %v1448, %v1455
    %v1458 = vshrl.u32 %v1440, %v1456
    %v1459 = vor.u32 %v1457, %v1458
    %v1460 = vsub.s32 4294967266, %v1455
    %v1461 = vadd.s32 %v1460, 127
    %v1462 = vshll.u32 %v1461, 23
    %v1463 = vor.u32 4788187, %v1462
    %v1464 = vand.u32 2147483647, %v1463
    %v1466 = vcvt.s32.f32 %v1459
    %v1467 = vmul.f32 %v1466, %v1464
    %v1468 = vxor.u32 %v1467, 2147483648
    %v1469 = vsel %vm1386, %v1468, %v1467
    %v1470 = vsub.s32 4, %v1446
    %v1471 = vsel %vm1386, %v1470, %v1446
    %v1472 = vsel %vm1385, %v1280, %v1469
    %v1473 = vsel %vm1385, 0, %v1471
    %v1474 = vcosq.f32.pop %v1472
    %v1475 = vsinq.f32.pop %v1472
    %vm1476 = vweird.f32 %v1280
    %v1477 = vand.u32 %v1473, 3
    %vm1478 = vcmp.lt.s32.totalorder %v1477, 2
    %vm1479 = vcmp.eq.s32.totalorder %v1477, 0
    %v1480 = vxor.u32 %v1475, 2147483648
    %v1481 = vsel %vm1479, %v1474, %v1480
    %vm1482 = vcmp.eq.s32.totalorder %v1477, 2
    %v1483 = vxor.u32 %v1474, 2147483648
    %v1484 = vsel %vm1482, %v1483, %v1475
    %v1485 = vsel %vm1478, %v1481, %v1484
    %v1486 = vsel %vm1476, nan, %v1485
    %v1487 = vld [vmem:[%s3] sm:$0xff]
    %v1488 = vand.u32 2147483647, %v1279
    %vm1489 = vcmp.le.f32.partialorder %v1488, 0.7853982
    %vm1490 = vcmp.lt.s32.totalorder %v1279, 0
    %v1491 = vand.u32 %v1279, 2139095040
    %v1492 = vshrl.u32 %v1491, 23
    %v1493 = vsub.s32 %v1492, 127
    %v1494 = vand.u32 2147483647, %v1279
    %v1495 = vand.u32 %v1494, 8388607
    %v1496 = vor.u32 %v1495, 8388608
    %v1497 = vsub.s32 0, %v1496
    %v1498 = vadd.s32 %v1493, 1
    %vm1499 = vcmp.gt.s32.totalorder %v1498, 0
    %v1500 = vsel %vm1499, %v1498, 0
    %v1501 = vshrl.u32 %v1500, 5
    %v1502 = vand.u32 %v1500, 31
    %v1503 = vsub.s32 32, %v1502
    %v1504 = vshrl.u32 683565275, %v1503
    %v1505 = vshll.u32 683565275, %v1502
    %v1506 = vshrl.u32 2475754826, %v1503
    %v1507 = vor.u32 %v1505, %v1506
    %v1508 = vshll.u32 2475754826, %v1502
    %v1509 = vshrl.u32 2131351028, %v1503
    %v1510 = vor.u32 %v1508, %v1509
    %v1511 = vshll.u32 2131351028, %v1502
    %v1512 = vshrl.u32 2102212464, %v1503
    %v1513 = vor.u32 %v1511, %v1512
    %v1514 = vshll.u32 2102212464, %v1502
    %v1515 = vshrl.u32 920167782, %v1503
    %v1516 = vor.u32 %v1514, %v1515
    %v1517 = vshll.u32 920167782, %v1502
    %v1518 = vshrl.u32 1326507024, %v1503
    %v1519 = vor.u32 %v1517, %v1518
    %vm1520 = vcmp.lt.s32.totalorder %v1501, 1
    %vm1521 = vcmp.lt.s32.totalorder %v1501, 2
    %vm1522 = vcmp.lt.s32.totalorder %v1501, 3
    %vm1523 = vcmp.lt.s32.totalorder %v1501, 4
    %v1524 = vsel %vm1520, %v1504, %v1507
    %v1525 = vsel %vm1523, %v1513, 2102212464
    %v1526 = vsel %vm1522, %v1510, %v1525
    %v1527 = vsel %vm1521, %v1524, %v1526
    %v1528 = vsel %vm1520, %v1507, %v1510
    %v1529 = vsel %vm1523, %v1516, 920167782
    %v1530 = vsel %vm1522, %v1513, %v1529
    %v1531 = vsel %vm1521, %v1528, %v1530
    %v1532 = vsel %vm1520, %v1510, %v1513
    %v1533 = vsel %vm1523, %v1519, 1326507024
    %v1534 = vsel %vm1522, %v1516, %v1533
    %v1535 = vsel %vm1521, %v1532, %v1534
    %v1536 = vshll.u32 %v1496, 8
    %v1537 = vmul.u32.u64.compose %v1536, %v1535
    %v1538 = vextract.low.u32 %v1537
    %v1539 = vextract.high.u32 %v1537
    %v1540 = vmul.u32.u64.compose %v1536, %v1531
    %v1541 = vextract.low.u32 %v1540
    %v1542 = vextract.high.u32 %v1540
    %v1543 = vmul.u32 %v1536, %v1527
    %v1544 = vadd.s32 %v1539, %v1541
    %vm1545 = vc.u32 %v1539, %v1541
    %v1546 = vadd.s32 %v1542, 1
    %v1547 = vsel %vm1545, %v1546, %v1542
    %v1548 = vadd.s32 %v1543, %v1547
    %v1549 = vadd.s32 %v1548, 536870912
    %v1550 = vshrl.u32 %v1549, 30
    %v1551 = vshll.u32 %v1550, 30
    %v1552 = vsub.s32 %v1548, %v1551
    %vm1553 = vcmp.lt.s32.totalorder %v1552, 0
    %v1554 = vsub.s32 0, %v1552
    %v1555 = vsel %vm1553, %v1554, %v1552
    %v1556 = vclz %v1555
    %v1557 = vsub.s32 %v1556, 2
    %vm1558 = vcmp.gt.s32.totalorder 0, %v1557
    %v1559 = vsel %vm1558, 0, %v1557
    %v1560 = vsub.s32 32, %v1559
    %v1561 = vshll.u32 %v1552, %v1559
    %v1562 = vshrl.u32 %v1544, %v1560
    %v1563 = vor.u32 %v1561, %v1562
    %v1564 = vsub.s32 4294967266, %v1559
    %v1565 = vadd.s32 %v1564, 127
    %v1566 = vshll.u32 %v1565, 23
    %v1567 = vor.u32 4788187, %v1566
    %v1568 = vand.u32 2147483647, %v1567
    %v1570 = vcvt.s32.f32 %v1563
    %v1571 = vmul.f32 %v1570, %v1568
    %v1572 = vxor.u32 %v1571, 2147483648
    %v1573 = vsel %vm1490, %v1572, %v1571
    %v1574 = vsub.s32 4, %v1550
    %v1575 = vsel %vm1490, %v1574, %v1550
    %v1576 = vsel %vm1489, %v1279, %v1573
    %v1577 = vsel %vm1489, 0, %v1575
    %v1578 = vcosq.f32.pop %v1576
    %v1579 = vsinq.f32.pop %v1576
    %vm1580 = vweird.f32 %v1279
    %v1581 = vadd.s32 %v1577, 3
    %v1582 = vand.u32 %v1581, 3
    %vm1583 = vcmp.lt.s32.totalorder %v1582, 2
    %vm1584 = vcmp.eq.s32.totalorder %v1582, 0
    %v1585 = vxor.u32 %v1579, 2147483648
    %v1586 = vsel %vm1584, %v1578, %v1585
    %vm1587 = vcmp.eq.s32.totalorder %v1582, 2
    %v1588 = vxor.u32 %v1578, 2147483648
    %v1589 = vsel %vm1587, %v1588, %v1579
    %v1590 = vsel %vm1583, %v1586, %v1589
    %v1591 = vsel %vm1580, nan, %v1590
    %v1592 = vand.u32 2147483647, %v1280
    %vm1593 = vcmp.le.f32.partialorder %v1592, 0.7853982
    %vm1594 = vcmp.lt.s32.totalorder %v1280, 0
    %v1595 = vand.u32 %v1280, 2139095040
    %v1596 = vshrl.u32 %v1595, 23
    %v1597 = vsub.s32 %v1596, 127
    %v1598 = vand.u32 2147483647, %v1280
    %v1599 = vand.u32 %v1598, 8388607
    %v1600 = vor.u32 %v1599, 8388608
    %v1601 = vsub.s32 0, %v1600
    %v1602 = vadd.s32 %v1597, 1
    %vm1603 = vcmp.gt.s32.totalorder %v1602, 0
    %v1604 = vsel %vm1603, %v1602, 0
    %v1605 = vshrl.u32 %v1604, 5
    %v1606 = vand.u32 %v1604, 31
    %v1607 = vsub.s32 32, %v1606
    %v1608 = vshrl.u32 683565275, %v1607
    %v1609 = vshll.u32 683565275, %v1606
    %v1610 = vshrl.u32 2475754826, %v1607
    %v1611 = vor.u32 %v1609, %v1610
    %v1612 = vshll.u32 2475754826, %v1606
    %v1613 = vshrl.u32 2131351028, %v1607
    %v1614 = vor.u32 %v1612, %v1613
    %v1615 = vshll.u32 2131351028, %v1606
    %v1616 = vshrl.u32 2102212464, %v1607
    %v1617 = vor.u32 %v1615, %v1616
    %v1618 = vshll.u32 2102212464, %v1606
    %v1619 = vshrl.u32 920167782, %v1607
    %v1620 = vor.u32 %v1618, %v1619
    %v1621 = vshll.u32 920167782, %v1606
    %v1622 = vshrl.u32 1326507024, %v1607
    %v1623 = vor.u32 %v1621, %v1622
    %vm1624 = vcmp.lt.s32.totalorder %v1605, 1
    %vm1625 = vcmp.lt.s32.totalorder %v1605, 2
    %vm1626 = vcmp.lt.s32.totalorder %v1605, 3
    %vm1627 = vcmp.lt.s32.totalorder %v1605, 4
    %v1628 = vsel %vm1624, %v1608, %v1611
    %v1629 = vsel %vm1627, %v1617, 2102212464
    %v1630 = vsel %vm1626, %v1614, %v1629
    %v1631 = vsel %vm1625, %v1628, %v1630
    %v1632 = vsel %vm1624, %v1611, %v1614
    %v1633 = vsel %vm1627, %v1620, 920167782
    %v1634 = vsel %vm1626, %v1617, %v1633
    %v1635 = vsel %vm1625, %v1632, %v1634
    %v1636 = vsel %vm1624, %v1614, %v1617
    %v1637 = vsel %vm1627, %v1623, 1326507024
    %v1638 = vsel %vm1626, %v1620, %v1637
    %v1639 = vsel %vm1625, %v1636, %v1638
    %v1640 = vshll.u32 %v1600, 8
    %v1641 = vmul.u32.u64.compose %v1640, %v1639
    %v1642 = vextract.low.u32 %v1641
    %v1643 = vextract.high.u32 %v1641
    %v1644 = vmul.u32.u64.compose %v1640, %v1635
    %v1645 = vextract.low.u32 %v1644
    %v1646 = vextract.high.u32 %v1644
    %v1647 = vmul.u32 %v1640, %v1631
    %v1648 = vadd.s32 %v1643, %v1645
    %vm1649 = vc.u32 %v1643, %v1645
    %v1650 = vadd.s32 %v1646, 1
    %v1651 = vsel %vm1649, %v1650, %v1646
    %v1652 = vadd.s32 %v1647, %v1651
    %v1653 = vadd.s32 %v1652, 536870912
    %v1654 = vshrl.u32 %v1653, 30
    %v1655 = vshll.u32 %v1654, 30
    %v1656 = vsub.s32 %v1652, %v1655
    %vm1657 = vcmp.lt.s32.totalorder %v1656, 0
    %v1658 = vsub.s32 0, %v1656
    %v1659 = vsel %vm1657, %v1658, %v1656
    %v1660 = vclz %v1659
    %v1661 = vsub.s32 %v1660, 2
    %vm1662 = vcmp.gt.s32.totalorder 0, %v1661
    %v1663 = vsel %vm1662, 0, %v1661
    %v1664 = vsub.s32 32, %v1663
    %v1665 = vshll.u32 %v1656, %v1663
    %v1666 = vshrl.u32 %v1648, %v1664
    %v1667 = vor.u32 %v1665, %v1666
    %v1668 = vsub.s32 4294967266, %v1663
    %v1669 = vadd.s32 %v1668, 127
    %v1670 = vshll.u32 %v1669, 23
    %v1671 = vor.u32 4788187, %v1670
    %v1672 = vand.u32 2147483647, %v1671
    %v1674 = vcvt.s32.f32 %v1667
    %v1675 = vmul.f32 %v1674, %v1672
    %v1676 = vxor.u32 %v1675, 2147483648
    %v1677 = vsel %vm1594, %v1676, %v1675
    %v1678 = vsub.s32 4, %v1654
    %v1679 = vsel %vm1594, %v1678, %v1654
    %v1680 = vsel %vm1593, %v1280, %v1677
    %v1681 = vsel %vm1593, 0, %v1679
    %v1682 = vcosq.f32.pop %v1680
    %v1683 = vsinq.f32.pop %v1680
    %vm1684 = vweird.f32 %v1280
    %v1685 = vadd.s32 %v1681, 3
    %v1686 = vand.u32 %v1685, 3
    %vm1687 = vcmp.lt.s32.totalorder %v1686, 2
    %vm1688 = vcmp.eq.s32.totalorder %v1686, 0
    %v1689 = vxor.u32 %v1683, 2147483648
    %v1690 = vsel %vm1688, %v1682, %v1689
    %vm1691 = vcmp.eq.s32.totalorder %v1686, 2
    %v1692 = vxor.u32 %v1682, 2147483648
    %v1693 = vsel %vm1691, %v1692, %v1683
    %v1694 = vsel %vm1687, %v1690, %v1693
    %v1695 = vsel %vm1684, nan, %v1694
    %v1696 = vld [vmem:[%s4] sm:$0xff]
    %v1698 = vsel %vm474, %v1591, 0
    %v1701 = vsel %vm474, %v1695, 0
    %1703 = vmatprep.subr.mxu0 0.0
    %1704 = vmatpush1.msra.mxu0 %v1696
    %1705 = vmatprep.subr.mxu0 0.0
    %1706 = vmatpush1.msra.mxu0 0.0
    %1707 = vmatprep.subr.mxu0 0.0
    %1708 = vmatpush1.msra.mxu0 0.0
    %1709 = vmatprep.subr.mxu0 0.0
    %1710 = vmatpush1.msra.mxu0 0.0
    %1711 = vmatprep.subr.mxu0 0.0
    %1712 = vmatpush1.msra.mxu0 0.0
    %1713 = vmatprep.subr.mxu0 0.0
    %1714 = vmatpush1.msra.mxu0 0.0
    %1715 = vmatprep.subr.mxu0 0.0
    %1716 = vmatpush1.msra.mxu0 0.0
    %1717 = vmatprep.subr.mxu0 0.0
    %1718 = vmatpush1.msra.mxu0 0.0
    %1719 = vmatprep.subr.mxu0 0.0
    %1720 = vmatpush1.msra.mxu0 0.0
    %1721 = vmatprep.subr.mxu0 0.0
    %1722 = vmatpush1.msra.mxu0 0.0
    %1723 = vmatprep.subr.mxu0 0.0
    %1724 = vmatpush1.msra.mxu0 0.0
    %1725 = vmatprep.subr.mxu0 0.0
    %1726 = vmatpush1.msra.mxu0 0.0
    %1727 = vmatprep.subr.mxu0 0.0
    %1728 = vmatpush1.msra.mxu0 0.0
    %1729 = vmatprep.subr.mxu0 0.0
    %1730 = vmatpush1.msra.mxu0 0.0
    %1731 = vmatprep.subr.mxu0 0.0
    %1732 = vmatpush1.msra.mxu0 0.0
    %1733 = vmatprep.subr.mxu0 0.0
    %1734 = vmatpush1.msra.mxu0 0.0
    %1735 = vmatprep.subr.mxu0 0.0
    %1736 = vmatpush1.msra.mxu0 0.0
    %1737 = vmatprep.subr.mxu0 0.0
    %1738 = vmatpush1.msra.mxu0 0.0
    %1739 = vmatprep.subr.mxu0 0.0
    %1740 = vmatpush1.msra.mxu0 0.0
    %1741 = vmatprep.subr.mxu0 0.0
    %1742 = vmatpush1.msra.mxu0 0.0
    %1743 = vmatprep.subr.mxu0 0.0
    %1744 = vmatpush1.msra.mxu0 0.0
    %1745 = vmatprep.subr.mxu0 0.0
    %1746 = vmatpush1.msra.mxu0 0.0
    %1747 = vmatprep.subr.mxu0 0.0
    %1748 = vmatpush1.msra.mxu0 0.0
    %1749 = vmatprep.subr.mxu0 0.0
    %1750 = vmatpush1.msra.mxu0 0.0
    %1751 = vmatprep.subr.mxu0 0.0
    %1752 = vmatpush1.msra.mxu0 0.0
    %1753 = vmatprep.subr.mxu0 0.0
    %1754 = vmatpush1.msra.mxu0 0.0
    %1755 = vmatprep.subr.mxu0 0.0
    %1756 = vmatpush1.msra.mxu0 0.0
    %1757 = vmatprep.subr.mxu0 0.0
    %1758 = vmatpush1.msra.mxu0 0.0
    %1759 = vmatprep.subr.mxu0 0.0
    %1760 = vmatpush1.msra.mxu0 0.0
    %1761 = vmatprep.subr.mxu0 0.0
    %1762 = vmatpush1.msra.mxu0 0.0
    %1763 = vmatprep.subr.mxu0 0.0
    %1764 = vmatpush1.msra.mxu0 0.0
    %1765 = vmatprep.subr.mxu0 0.0
    %1766 = vmatpush1.msra.mxu0 0.0
    %1767 = vmatprep.mubr.f32.mxu0 0.0
    %1768 = vmatmul.mubr.f32.gmra.mrb[0].mxu0 %v1698
    %v1769 = vpop.f32.mrb[0].mxu0
    %v1770 = vadd.f32 0.0, %v1769
    %v1771 = vpop.f32.mrb[0].mxu0
    %1772 = vmatprep.mubr.f32.mxu0 0.0
    %1773 = vmatmul.mubr.f32.gmra.mrb[0].mxu0 %v1701
    %v1774 = vpop.f32.mrb[0].mxu0
    %v1775 = vadd.f32 0.0, %v1774
    %v1776 = vpop.f32.mrb[0].mxu0
    %1777 = vdwg.mxu0
    %v1779 = vsel %vm474, %v1383, 0
    %v1782 = vsel %vm474, %v1486, 0
    %1784 = vmatprep.subr.mxu0 0.0
    %1785 = vmatpush1.msra.mxu0 %v1487
    %1786 = vmatprep.subr.mxu0 0.0
    %1787 = vmatpush1.msra.mxu0 0.0
    %1788 = vmatprep.subr.mxu0 0.0
    %1789 = vmatpush1.msra.mxu0 0.0
    %1790 = vmatprep.subr.mxu0 0.0
    %1791 = vmatpush1.msra.mxu0 0.0
    %1792 = vmatprep.subr.mxu0 0.0
    %1793 = vmatpush1.msra.mxu0 0.0
    %1794 = vmatprep.subr.mxu0 0.0
    %1795 = vmatpush1.msra.mxu0 0.0
    %1796 = vmatprep.subr.mxu0 0.0
    %1797 = vmatpush1.msra.mxu0 0.0
    %1798 = vmatprep.subr.mxu0 0.0
    %1799 = vmatpush1.msra.mxu0 0.0
    %1800 = vmatprep.subr.mxu0 0.0
    %1801 = vmatpush1.msra.mxu0 0.0
    %1802 = vmatprep.subr.mxu0 0.0
    %1803 = vmatpush1.msra.mxu0 0.0
    %1804 = vmatprep.subr.mxu0 0.0
    %1805 = vmatpush1.msra.mxu0 0.0
    %1806 = vmatprep.subr.mxu0 0.0
    %1807 = vmatpush1.msra.mxu0 0.0
    %1808 = vmatprep.subr.mxu0 0.0
    %1809 = vmatpush1.msra.mxu0 0.0
    %1810 = vmatprep.subr.mxu0 0.0
    %1811 = vmatpush1.msra.mxu0 0.0
    %1812 = vmatprep.subr.mxu0 0.0
    %1813 = vmatpush1.msra.mxu0 0.0
    %1814 = vmatprep.subr.mxu0 0.0
    %1815 = vmatpush1.msra.mxu0 0.0
    %1816 = vmatprep.subr.mxu0 0.0
    %1817 = vmatpush1.msra.mxu0 0.0
    %1818 = vmatprep.subr.mxu0 0.0
    %1819 = vmatpush1.msra.mxu0 0.0
    %1820 = vmatprep.subr.mxu0 0.0
    %1821 = vmatpush1.msra.mxu0 0.0
    %1822 = vmatprep.subr.mxu0 0.0
    %1823 = vmatpush1.msra.mxu0 0.0
    %1824 = vmatprep.subr.mxu0 0.0
    %1825 = vmatpush1.msra.mxu0 0.0
    %1826 = vmatprep.subr.mxu0 0.0
    %1827 = vmatpush1.msra.mxu0 0.0
    %1828 = vmatprep.subr.mxu0 0.0
    %1829 = vmatpush1.msra.mxu0 0.0
    %1830 = vmatprep.subr.mxu0 0.0
    %1831 = vmatpush1.msra.mxu0 0.0
    %1832 = vmatprep.subr.mxu0 0.0
    %1833 = vmatpush1.msra.mxu0 0.0
    %1834 = vmatprep.subr.mxu0 0.0
    %1835 = vmatpush1.msra.mxu0 0.0
    %1836 = vmatprep.subr.mxu0 0.0
    %1837 = vmatpush1.msra.mxu0 0.0
    %1838 = vmatprep.subr.mxu0 0.0
    %1839 = vmatpush1.msra.mxu0 0.0
    %1840 = vmatprep.subr.mxu0 0.0
    %1841 = vmatpush1.msra.mxu0 0.0
    %1842 = vmatprep.subr.mxu0 0.0
    %1843 = vmatpush1.msra.mxu0 0.0
    %1844 = vmatprep.subr.mxu0 0.0
    %1845 = vmatpush1.msra.mxu0 0.0
    %1846 = vmatprep.subr.mxu0 0.0
    %1847 = vmatpush1.msra.mxu0 0.0
    %1848 = vmatprep.mubr.f32.mxu0 0.0
    %1849 = vmatmul.mubr.f32.gmra.mrb[0].mxu0 %v1779
    %v1850 = vpop.f32.mrb[0].mxu0
    %v1851 = vadd.f32 %v1770, %v1850
    %v1852 = vpop.f32.mrb[0].mxu0
    %1853 = vmatprep.mubr.f32.mxu0 0.0
    %1854 = vmatmul.mubr.f32.gmra.mrb[0].mxu0 %v1782
    %v1855 = vpop.f32.mrb[0].mxu0
    %v1856 = vadd.f32 %v1775, %v1855
    %v1857 = vpop.f32.mrb[0].mxu0
    %1858 = vdwg.mxu0
    %v1859 = vadd.f32 %v1851, %v641
    %v1860 = vadd.f32 %v1856, %v641
    %v1861 = vmax.f32 %v1859, 0.0
    %v1862 = vmax.f32 %v1860, 0.0
    %v1863 = vpack.c.bf16 %v1862, %v1861
    %1865 = vrot.lane.b32.xlu0 %v1863, 32
    %v1866 = vpop.permute.xlu0 %1865
    %vm1868 = vcmask 392448
    %1869 = vst.msk [vmem:[#allocation2] sm:$0xff] %vm1868, %v1866
    %v1870 = vld [vmem:[%s0] sm:$0xff]
    %v1871 = vld [vmem:[%s0 + $0x8] sm:$0xff]
    %v1872 = vmul.f32 %v1870, 6.2831855
    %v1873 = vmul.f32 %v1871, 6.2831855
    %v1874 = vld [vmem:[%s2 + $0x3] sm:$0x1]
    %1876 = vset.pattern.permute.xlu0 3
    %1877 = vperm.xlu0 %1876, %v1872
    %v1878 = vpop.permute.xlu0 %1877
    %1881 = vset.pattern.permute.xlu0 3
    %1882 = vperm.xlu0 %1881, %v1873
    %v1883 = vpop.permute.xlu0 %1882
    %v1885 = vlaneseq
    %v1886 = vshrl.u32 %v1885, 7
    %v1887 = vsub.s32 0, %v1886
    %v1888 = vrot.slane %v1874, %v1887
    %v1889 = vmul.f32 %v1878, %v1888
    %v1890 = vmul.f32 %v1883, %v1888
    %v1891 = vand.u32 2147483647, %v1889
    %vm1892 = vcmp.le.f32.partialorder %v1891, 0.7853982
    %vm1893 = vcmp.lt.s32.totalorder %v1889, 0
    %v1894 = vand.u32 %v1889, 2139095040
    %v1895 = vshrl.u32 %v1894, 23
    %v1896 = vsub.s32 %v1895, 127
    %v1897 = vand.u32 2147483647, %v1889
    %v1898 = vand.u32 %v1897, 8388607
    %v1899 = vor.u32 %v1898, 8388608
    %v1900 = vsub.s32 0, %v1899
    %v1901 = vadd.s32 %v1896, 1
    %vm1902 = vcmp.gt.s32.totalorder %v1901, 0
    %v1903 = vsel %vm1902, %v1901, 0
    %v1904 = vshrl.u32 %v1903, 5
    %v1905 = vand.u32 %v1903, 31
    %v1906 = vsub.s32 32, %v1905
    %v1907 = vshrl.u32 683565275, %v1906
    %v1908 = vshll.u32 683565275, %v1905
    %v1909 = vshrl.u32 2475754826, %v1906
    %v1910 = vor.u32 %v1908, %v1909
    %v1911 = vshll.u32 2475754826, %v1905
    %v1912 = vshrl.u32 2131351028, %v1906
    %v1913 = vor.u32 %v1911, %v1912
    %v1914 = vshll.u32 2131351028, %v1905
    %v1915 = vshrl.u32 2102212464, %v1906
    %v1916 = vor.u32 %v1914, %v1915
    %v1917 = vshll.u32 2102212464, %v1905
    %v1918 = vshrl.u32 920167782, %v1906
    %v1919 = vor.u32 %v1917, %v1918
    %v1920 = vshll.u32 920167782, %v1905
    %v1921 = vshrl.u32 1326507024, %v1906
    %v1922 = vor.u32 %v1920, %v1921
    %vm1923 = vcmp.lt.s32.totalorder %v1904, 1
    %vm1924 = vcmp.lt.s32.totalorder %v1904, 2
    %vm1925 = vcmp.lt.s32.totalorder %v1904, 3
    %vm1926 = vcmp.lt.s32.totalorder %v1904, 4
    %v1927 = vsel %vm1923, %v1907, %v1910
    %v1928 = vsel %vm1926, %v1916, 2102212464
    %v1929 = vsel %vm1925, %v1913, %v1928
    %v1930 = vsel %vm1924, %v1927, %v1929
    %v1931 = vsel %vm1923, %v1910, %v1913
    %v1932 = vsel %vm1926, %v1919, 920167782
    %v1933 = vsel %vm1925, %v1916, %v1932
    %v1934 = vsel %vm1924, %v1931, %v1933
    %v1935 = vsel %vm1923, %v1913, %v1916
    %v1936 = vsel %vm1926, %v1922, 1326507024
    %v1937 = vsel %vm1925, %v1919, %v1936
    %v1938 = vsel %vm1924, %v1935, %v1937
    %v1939 = vshll.u32 %v1899, 8
    %v1940 = vmul.u32.u64.compose %v1939, %v1938
    %v1941 = vextract.low.u32 %v1940
    %v1942 = vextract.high.u32 %v1940
    %v1943 = vmul.u32.u64.compose %v1939, %v1934
    %v1944 = vextract.low.u32 %v1943
    %v1945 = vextract.high.u32 %v1943
    %v1946 = vmul.u32 %v1939, %v1930
    %v1947 = vadd.s32 %v1942, %v1944
    %vm1948 = vc.u32 %v1942, %v1944
    %v1949 = vadd.s32 %v1945, 1
    %v1950 = vsel %vm1948, %v1949, %v1945
    %v1951 = vadd.s32 %v1946, %v1950
    %v1952 = vadd.s32 %v1951, 536870912
    %v1953 = vshrl.u32 %v1952, 30
    %v1954 = vshll.u32 %v1953, 30
    %v1955 = vsub.s32 %v1951, %v1954
    %vm1956 = vcmp.lt.s32.totalorder %v1955, 0
    %v1957 = vsub.s32 0, %v1955
    %v1958 = vsel %vm1956, %v1957, %v1955
    %v1959 = vclz %v1958
    %v1960 = vsub.s32 %v1959, 2
    %vm1961 = vcmp.gt.s32.totalorder 0, %v1960
    %v1962 = vsel %vm1961, 0, %v1960
    %v1963 = vsub.s32 32, %v1962
    %v1964 = vshll.u32 %v1955, %v1962
    %v1965 = vshrl.u32 %v1947, %v1963
    %v1966 = vor.u32 %v1964, %v1965
    %v1967 = vsub.s32 4294967266, %v1962
    %v1968 = vadd.s32 %v1967, 127
    %v1969 = vshll.u32 %v1968, 23
    %v1970 = vor.u32 4788187, %v1969
    %v1971 = vand.u32 2147483647, %v1970
    %v1973 = vcvt.s32.f32 %v1966
    %v1974 = vmul.f32 %v1973, %v1971
    %v1975 = vxor.u32 %v1974, 2147483648
    %v1976 = vsel %vm1893, %v1975, %v1974
    %v1977 = vsub.s32 4, %v1953
    %v1978 = vsel %vm1893, %v1977, %v1953
    %v1979 = vsel %vm1892, %v1889, %v1976
    %v1980 = vsel %vm1892, 0, %v1978
    %v1981 = vcosq.f32.pop %v1979
    %v1982 = vsinq.f32.pop %v1979
    %vm1983 = vweird.f32 %v1889
    %v1984 = vand.u32 %v1980, 3
    %vm1985 = vcmp.lt.s32.totalorder %v1984, 2
    %vm1986 = vcmp.eq.s32.totalorder %v1984, 0
    %v1987 = vxor.u32 %v1982, 2147483648
    %v1988 = vsel %vm1986, %v1981, %v1987
    %vm1989 = vcmp.eq.s32.totalorder %v1984, 2
    %v1990 = vxor.u32 %v1981, 2147483648
    %v1991 = vsel %vm1989, %v1990, %v1982
    %v1992 = vsel %vm1985, %v1988, %v1991
    %v1993 = vsel %vm1983, nan, %v1992
    %v1994 = vand.u32 2147483647, %v1890
    %vm1995 = vcmp.le.f32.partialorder %v1994, 0.7853982
    %vm1996 = vcmp.lt.s32.totalorder %v1890, 0
    %v1997 = vand.u32 %v1890, 2139095040
    %v1998 = vshrl.u32 %v1997, 23
    %v1999 = vsub.s32 %v1998, 127
    %v2000 = vand.u32 2147483647, %v1890
    %v2001 = vand.u32 %v2000, 8388607
    %v2002 = vor.u32 %v2001, 8388608
    %v2003 = vsub.s32 0, %v2002
    %v2004 = vadd.s32 %v1999, 1
    %vm2005 = vcmp.gt.s32.totalorder %v2004, 0
    %v2006 = vsel %vm2005, %v2004, 0
    %v2007 = vshrl.u32 %v2006, 5
    %v2008 = vand.u32 %v2006, 31
    %v2009 = vsub.s32 32, %v2008
    %v2010 = vshrl.u32 683565275, %v2009
    %v2011 = vshll.u32 683565275, %v2008
    %v2012 = vshrl.u32 2475754826, %v2009
    %v2013 = vor.u32 %v2011, %v2012
    %v2014 = vshll.u32 2475754826, %v2008
    %v2015 = vshrl.u32 2131351028, %v2009
    %v2016 = vor.u32 %v2014, %v2015
    %v2017 = vshll.u32 2131351028, %v2008
    %v2018 = vshrl.u32 2102212464, %v2009
    %v2019 = vor.u32 %v2017, %v2018
    %v2020 = vshll.u32 2102212464, %v2008
    %v2021 = vshrl.u32 920167782, %v2009
    %v2022 = vor.u32 %v2020, %v2021
    %v2023 = vshll.u32 920167782, %v2008
    %v2024 = vshrl.u32 1326507024, %v2009
    %v2025 = vor.u32 %v2023, %v2024
    %vm2026 = vcmp.lt.s32.totalorder %v2007, 1
    %vm2027 = vcmp.lt.s32.totalorder %v2007, 2
    %vm2028 = vcmp.lt.s32.totalorder %v2007, 3
    %vm2029 = vcmp.lt.s32.totalorder %v2007, 4
    %v2030 = vsel %vm2026, %v2010, %v2013
    %v2031 = vsel %vm2029, %v2019, 2102212464
    %v2032 = vsel %vm2028, %v2016, %v2031
    %v2033 = vsel %vm2027, %v2030, %v2032
    %v2034 = vsel %vm2026, %v2013, %v2016
    %v2035 = vsel %vm2029, %v2022, 920167782
    %v2036 = vsel %vm2028, %v2019, %v2035
    %v2037 = vsel %vm2027, %v2034, %v2036
    %v2038 = vsel %vm2026, %v2016, %v2019
    %v2039 = vsel %vm2029, %v2025, 1326507024
    %v2040 = vsel %vm2028, %v2022, %v2039
    %v2041 = vsel %vm2027, %v2038, %v2040
    %v2042 = vshll.u32 %v2002, 8
    %v2043 = vmul.u32.u64.compose %v2042, %v2041
    %v2044 = vextract.low.u32 %v2043
    %v2045 = vextract.high.u32 %v2043
    %v2046 = vmul.u32.u64.compose %v2042, %v2037
    %v2047 = vextract.low.u32 %v2046
    %v2048 = vextract.high.u32 %v2046
    %v2049 = vmul.u32 %v2042, %v2033
    %v2050 = vadd.s32 %v2045, %v2047
    %vm2051 = vc.u32 %v2045, %v2047
    %v2052 = vadd.s32 %v2048, 1
    %v2053 = vsel %vm2051, %v2052, %v2048
    %v2054 = vadd.s32 %v2049, %v2053
    %v2055 = vadd.s32 %v2054, 536870912
    %v2056 = vshrl.u32 %v2055, 30
    %v2057 = vshll.u32 %v2056, 30
    %v2058 = vsub.s32 %v2054, %v2057
    %vm2059 = vcmp.lt.s32.totalorder %v2058, 0
    %v2060 = vsub.s32 0, %v2058
    %v2061 = vsel %vm2059, %v2060, %v2058
    %v2062 = vclz %v2061
    %v2063 = vsub.s32 %v2062, 2
    %vm2064 = vcmp.gt.s32.totalorder 0, %v2063
    %v2065 = vsel %vm2064, 0, %v2063
    %v2066 = vsub.s32 32, %v2065
    %v2067 = vshll.u32 %v2058, %v2065
    %v2068 = vshrl.u32 %v2050, %v2066
    %v2069 = vor.u32 %v2067, %v2068
    %v2070 = vsub.s32 4294967266, %v2065
    %v2071 = vadd.s32 %v2070, 127
    %v2072 = vshll.u32 %v2071, 23
    %v2073 = vor.u32 4788187, %v2072
    %v2074 = vand.u32 2147483647, %v2073
    %v2076 = vcvt.s32.f32 %v2069
    %v2077 = vmul.f32 %v2076, %v2074
    %v2078 = vxor.u32 %v2077, 2147483648
    %v2079 = vsel %vm1996, %v2078, %v2077
    %v2080 = vsub.s32 4, %v2056
    %v2081 = vsel %vm1996, %v2080, %v2056
    %v2082 = vsel %vm1995, %v1890, %v2079
    %v2083 = vsel %vm1995, 0, %v2081
    %v2084 = vcosq.f32.pop %v2082
    %v2085 = vsinq.f32.pop %v2082
    %vm2086 = vweird.f32 %v1890
    %v2087 = vand.u32 %v2083, 3
    %vm2088 = vcmp.lt.s32.totalorder %v2087, 2
    %vm2089 = vcmp.eq.s32.totalorder %v2087, 0
    %v2090 = vxor.u32 %v2085, 2147483648
    %v2091 = vsel %vm2089, %v2084, %v2090
    %vm2092 = vcmp.eq.s32.totalorder %v2087, 2
    %v2093 = vxor.u32 %v2084, 2147483648
    %v2094 = vsel %vm2092, %v2093, %v2085
    %v2095 = vsel %vm2088, %v2091, %v2094
    %v2096 = vsel %vm2086, nan, %v2095
    %v2097 = vld [vmem:[%s3] sm:$0xff]
    %v2098 = vand.u32 2147483647, %v1889
    %vm2099 = vcmp.le.f32.partialorder %v2098, 0.7853982
    %vm2100 = vcmp.lt.s32.totalorder %v1889, 0
    %v2101 = vand.u32 %v1889, 2139095040
    %v2102 = vshrl.u32 %v2101, 23
    %v2103 = vsub.s32 %v2102, 127
    %v2104 = vand.u32 2147483647, %v1889
    %v2105 = vand.u32 %v2104, 8388607
    %v2106 = vor.u32 %v2105, 8388608
    %v2107 = vsub.s32 0, %v2106
    %v2108 = vadd.s32 %v2103, 1
    %vm2109 = vcmp.gt.s32.totalorder %v2108, 0
    %v2110 = vsel %vm2109, %v2108, 0
    %v2111 = vshrl.u32 %v2110, 5
    %v2112 = vand.u32 %v2110, 31
    %v2113 = vsub.s32 32, %v2112
    %v2114 = vshrl.u32 683565275, %v2113
    %v2115 = vshll.u32 683565275, %v2112
    %v2116 = vshrl.u32 2475754826, %v2113
    %v2117 = vor.u32 %v2115, %v2116
    %v2118 = vshll.u32 2475754826, %v2112
    %v2119 = vshrl.u32 2131351028, %v2113
    %v2120 = vor.u32 %v2118, %v2119
    %v2121 = vshll.u32 2131351028, %v2112
    %v2122 = vshrl.u32 2102212464, %v2113
    %v2123 = vor.u32 %v2121, %v2122
    %v2124 = vshll.u32 2102212464, %v2112
    %v2125 = vshrl.u32 920167782, %v2113
    %v2126 = vor.u32 %v2124, %v2125
    %v2127 = vshll.u32 920167782, %v2112
    %v2128 = vshrl.u32 1326507024, %v2113
    %v2129 = vor.u32 %v2127, %v2128
    %vm2130 = vcmp.lt.s32.totalorder %v2111, 1
    %vm2131 = vcmp.lt.s32.totalorder %v2111, 2
    %vm2132 = vcmp.lt.s32.totalorder %v2111, 3
    %vm2133 = vcmp.lt.s32.totalorder %v2111, 4
    %v2134 = vsel %vm2130, %v2114, %v2117
    %v2135 = vsel %vm2133, %v2123, 2102212464
    %v2136 = vsel %vm2132, %v2120, %v2135
    %v2137 = vsel %vm2131, %v2134, %v2136
    %v2138 = vsel %vm2130, %v2117, %v2120
    %v2139 = vsel %vm2133, %v2126, 920167782
    %v2140 = vsel %vm2132, %v2123, %v2139
    %v2141 = vsel %vm2131, %v2138, %v2140
    %v2142 = vsel %vm2130, %v2120, %v2123
    %v2143 = vsel %vm2133, %v2129, 1326507024
    %v2144 = vsel %vm2132, %v2126, %v2143
    %v2145 = vsel %vm2131, %v2142, %v2144
    %v2146 = vshll.u32 %v2106, 8
    %v2147 = vmul.u32.u64.compose %v2146, %v2145
    %v2148 = vextract.low.u32 %v2147
    %v2149 = vextract.high.u32 %v2147
    %v2150 = vmul.u32.u64.compose %v2146, %v2141
    %v2151 = vextract.low.u32 %v2150
    %v2152 = vextract.high.u32 %v2150
    %v2153 = vmul.u32 %v2146, %v2137
    %v2154 = vadd.s32 %v2149, %v2151
    %vm2155 = vc.u32 %v2149, %v2151
    %v2156 = vadd.s32 %v2152, 1
    %v2157 = vsel %vm2155, %v2156, %v2152
    %v2158 = vadd.s32 %v2153, %v2157
    %v2159 = vadd.s32 %v2158, 536870912
    %v2160 = vshrl.u32 %v2159, 30
    %v2161 = vshll.u32 %v2160, 30
    %v2162 = vsub.s32 %v2158, %v2161
    %vm2163 = vcmp.lt.s32.totalorder %v2162, 0
    %v2164 = vsub.s32 0, %v2162
    %v2165 = vsel %vm2163, %v2164, %v2162
    %v2166 = vclz %v2165
    %v2167 = vsub.s32 %v2166, 2
    %vm2168 = vcmp.gt.s32.totalorder 0, %v2167
    %v2169 = vsel %vm2168, 0, %v2167
    %v2170 = vsub.s32 32, %v2169
    %v2171 = vshll.u32 %v2162, %v2169
    %v2172 = vshrl.u32 %v2154, %v2170
    %v2173 = vor.u32 %v2171, %v2172
    %v2174 = vsub.s32 4294967266, %v2169
    %v2175 = vadd.s32 %v2174, 127
    %v2176 = vshll.u32 %v2175, 23
    %v2177 = vor.u32 4788187, %v2176
    %v2178 = vand.u32 2147483647, %v2177
    %v2180 = vcvt.s32.f32 %v2173
    %v2181 = vmul.f32 %v2180, %v2178
    %v2182 = vxor.u32 %v2181, 2147483648
    %v2183 = vsel %vm2100, %v2182, %v2181
    %v2184 = vsub.s32 4, %v2160
    %v2185 = vsel %vm2100, %v2184, %v2160
    %v2186 = vsel %vm2099, %v1889, %v2183
    %v2187 = vsel %vm2099, 0, %v2185
    %v2188 = vcosq.f32.pop %v2186
    %v2189 = vsinq.f32.pop %v2186
    %vm2190 = vweird.f32 %v1889
    %v2191 = vadd.s32 %v2187, 3
    %v2192 = vand.u32 %v2191, 3
    %vm2193 = vcmp.lt.s32.totalorder %v2192, 2
    %vm2194 = vcmp.eq.s32.totalorder %v2192, 0
    %v2195 = vxor.u32 %v2189, 2147483648
    %v2196 = vsel %vm2194, %v2188, %v2195
    %vm2197 = vcmp.eq.s32.totalorder %v2192, 2
    %v2198 = vxor.u32 %v2188, 2147483648
    %v2199 = vsel %vm2197, %v2198, %v2189
    %v2200 = vsel %vm2193, %v2196, %v2199
    %v2201 = vsel %vm2190, nan, %v2200
    %v2202 = vand.u32 2147483647, %v1890
    %vm2203 = vcmp.le.f32.partialorder %v2202, 0.7853982
    %vm2204 = vcmp.lt.s32.totalorder %v1890, 0
    %v2205 = vand.u32 %v1890, 2139095040
    %v2206 = vshrl.u32 %v2205, 23
    %v2207 = vsub.s32 %v2206, 127
    %v2208 = vand.u32 2147483647, %v1890
    %v2209 = vand.u32 %v2208, 8388607
    %v2210 = vor.u32 %v2209, 8388608
    %v2211 = vsub.s32 0, %v2210
    %v2212 = vadd.s32 %v2207, 1
    %vm2213 = vcmp.gt.s32.totalorder %v2212, 0
    %v2214 = vsel %vm2213, %v2212, 0
    %v2215 = vshrl.u32 %v2214, 5
    %v2216 = vand.u32 %v2214, 31
    %v2217 = vsub.s32 32, %v2216
    %v2218 = vshrl.u32 683565275, %v2217
    %v2219 = vshll.u32 683565275, %v2216
    %v2220 = vshrl.u32 2475754826, %v2217
    %v2221 = vor.u32 %v2219, %v2220
    %v2222 = vshll.u32 2475754826, %v2216
    %v2223 = vshrl.u32 2131351028, %v2217
    %v2224 = vor.u32 %v2222, %v2223
    %v2225 = vshll.u32 2131351028, %v2216
    %v2226 = vshrl.u32 2102212464, %v2217
    %v2227 = vor.u32 %v2225, %v2226
    %v2228 = vshll.u32 2102212464, %v2216
    %v2229 = vshrl.u32 920167782, %v2217
    %v2230 = vor.u32 %v2228, %v2229
    %v2231 = vshll.u32 920167782, %v2216
    %v2232 = vshrl.u32 1326507024, %v2217
    %v2233 = vor.u32 %v2231, %v2232
    %vm2234 = vcmp.lt.s32.totalorder %v2215, 1
    %vm2235 = vcmp.lt.s32.totalorder %v2215, 2
    %vm2236 = vcmp.lt.s32.totalorder %v2215, 3
    %vm2237 = vcmp.lt.s32.totalorder %v2215, 4
    %v2238 = vsel %vm2234, %v2218, %v2221
    %v2239 = vsel %vm2237, %v2227, 2102212464
    %v2240 = vsel %vm2236, %v2224, %v2239
    %v2241 = vsel %vm2235, %v2238, %v2240
    %v2242 = vsel %vm2234, %v2221, %v2224
    %v2243 = vsel %vm2237, %v2230, 920167782
    %v2244 = vsel %vm2236, %v2227, %v2243
    %v2245 = vsel %vm2235, %v2242, %v2244
    %v2246 = vsel %vm2234, %v2224, %v2227
    %v2247 = vsel %vm2237, %v2233, 1326507024
    %v2248 = vsel %vm2236, %v2230, %v2247
    %v2249 = vsel %vm2235, %v2246, %v2248
    %v2250 = vshll.u32 %v2210, 8
    %v2251 = vmul.u32.u64.compose %v2250, %v2249
    %v2252 = vextract.low.u32 %v2251
    %v2253 = vextract.high.u32 %v2251
    %v2254 = vmul.u32.u64.compose %v2250, %v2245
    %v2255 = vextract.low.u32 %v2254
    %v2256 = vextract.high.u32 %v2254
    %v2257 = vmul.u32 %v2250, %v2241
    %v2258 = vadd.s32 %v2253, %v2255
    %vm2259 = vc.u32 %v2253, %v2255
    %v2260 = vadd.s32 %v2256, 1
    %v2261 = vsel %vm2259, %v2260, %v2256
    %v2262 = vadd.s32 %v2257, %v2261
    %v2263 = vadd.s32 %v2262, 536870912
    %v2264 = vshrl.u32 %v2263, 30
    %v2265 = vshll.u32 %v2264, 30
    %v2266 = vsub.s32 %v2262, %v2265
    %vm2267 = vcmp.lt.s32.totalorder %v2266, 0
    %v2268 = vsub.s32 0, %v2266
    %v2269 = vsel %vm2267, %v2268, %v2266
    %v2270 = vclz %v2269
    %v2271 = vsub.s32 %v2270, 2
    %vm2272 = vcmp.gt.s32.totalorder 0, %v2271
    %v2273 = vsel %vm2272, 0, %v2271
    %v2274 = vsub.s32 32, %v2273
    %v2275 = vshll.u32 %v2266, %v2273
    %v2276 = vshrl.u32 %v2258, %v2274
    %v2277 = vor.u32 %v2275, %v2276
    %v2278 = vsub.s32 4294967266, %v2273
    %v2279 = vadd.s32 %v2278, 127
    %v2280 = vshll.u32 %v2279, 23
    %v2281 = vor.u32 4788187, %v2280
    %v2282 = vand.u32 2147483647, %v2281
    %v2284 = vcvt.s32.f32 %v2277
    %v2285 = vmul.f32 %v2284, %v2282
    %v2286 = vxor.u32 %v2285, 2147483648
    %v2287 = vsel %vm2204, %v2286, %v2285
    %v2288 = vsub.s32 4, %v2264
    %v2289 = vsel %vm2204, %v2288, %v2264
    %v2290 = vsel %vm2203, %v1890, %v2287
    %v2291 = vsel %vm2203, 0, %v2289
    %v2292 = vcosq.f32.pop %v2290
    %v2293 = vsinq.f32.pop %v2290
    %vm2294 = vweird.f32 %v1890
    %v2295 = vadd.s32 %v2291, 3
    %v2296 = vand.u32 %v2295, 3
    %vm2297 = vcmp.lt.s32.totalorder %v2296, 2
    %vm2298 = vcmp.eq.s32.totalorder %v2296, 0
    %v2299 = vxor.u32 %v2293, 2147483648
    %v2300 = vsel %vm2298, %v2292, %v2299
    %vm2301 = vcmp.eq.s32.totalorder %v2296, 2
    %v2302 = vxor.u32 %v2292, 2147483648
    %v2303 = vsel %vm2301, %v2302, %v2293
    %v2304 = vsel %vm2297, %v2300, %v2303
    %v2305 = vsel %vm2294, nan, %v2304
    %v2306 = vld [vmem:[%s4] sm:$0xff]
    %v2308 = vsel %vm474, %v2201, 0
    %v2311 = vsel %vm474, %v2305, 0
    %2313 = vmatprep.subr.mxu0 0.0
    %2314 = vmatpush1.msra.mxu0 %v2306
    %2315 = vmatprep.subr.mxu0 0.0
    %2316 = vmatpush1.msra.mxu0 0.0
    %2317 = vmatprep.subr.mxu0 0.0
    %2318 = vmatpush1.msra.mxu0 0.0
    %2319 = vmatprep.subr.mxu0 0.0
    %2320 = vmatpush1.msra.mxu0 0.0
    %2321 = vmatprep.subr.mxu0 0.0
    %2322 = vmatpush1.msra.mxu0 0.0
    %2323 = vmatprep.subr.mxu0 0.0
    %2324 = vmatpush1.msra.mxu0 0.0
    %2325 = vmatprep.subr.mxu0 0.0
    %2326 = vmatpush1.msra.mxu0 0.0
    %2327 = vmatprep.subr.mxu0 0.0
    %2328 = vmatpush1.msra.mxu0 0.0
    %2329 = vmatprep.subr.mxu0 0.0
    %2330 = vmatpush1.msra.mxu0 0.0
    %2331 = vmatprep.subr.mxu0 0.0
    %2332 = vmatpush1.msra.mxu0 0.0
    %2333 = vmatprep.subr.mxu0 0.0
    %2334 = vmatpush1.msra.mxu0 0.0
    %2335 = vmatprep.subr.mxu0 0.0
    %2336 = vmatpush1.msra.mxu0 0.0
    %2337 = vmatprep.subr.mxu0 0.0
    %2338 = vmatpush1.msra.mxu0 0.0
    %2339 = vmatprep.subr.mxu0 0.0
    %2340 = vmatpush1.msra.mxu0 0.0
    %2341 = vmatprep.subr.mxu0 0.0
    %2342 = vmatpush1.msra.mxu0 0.0
    %2343 = vmatprep.subr.mxu0 0.0
    %2344 = vmatpush1.msra.mxu0 0.0
    %2345 = vmatprep.subr.mxu0 0.0
    %2346 = vmatpush1.msra.mxu0 0.0
    %2347 = vmatprep.subr.mxu0 0.0
    %2348 = vmatpush1.msra.mxu0 0.0
    %2349 = vmatprep.subr.mxu0 0.0
    %2350 = vmatpush1.msra.mxu0 0.0
    %2351 = vmatprep.subr.mxu0 0.0
    %2352 = vmatpush1.msra.mxu0 0.0
    %2353 = vmatprep.subr.mxu0 0.0
    %2354 = vmatpush1.msra.mxu0 0.0
    %2355 = vmatprep.subr.mxu0 0.0
    %2356 = vmatpush1.msra.mxu0 0.0
    %2357 = vmatprep.subr.mxu0 0.0
    %2358 = vmatpush1.msra.mxu0 0.0
    %2359 = vmatprep.subr.mxu0 0.0
    %2360 = vmatpush1.msra.mxu0 0.0
    %2361 = vmatprep.subr.mxu0 0.0
    %2362 = vmatpush1.msra.mxu0 0.0
    %2363 = vmatprep.subr.mxu0 0.0
    %2364 = vmatpush1.msra.mxu0 0.0
    %2365 = vmatprep.subr.mxu0 0.0
    %2366 = vmatpush1.msra.mxu0 0.0
    %2367 = vmatprep.subr.mxu0 0.0
    %2368 = vmatpush1.msra.mxu0 0.0
    %2369 = vmatprep.subr.mxu0 0.0
    %2370 = vmatpush1.msra.mxu0 0.0
    %2371 = vmatprep.subr.mxu0 0.0
    %2372 = vmatpush1.msra.mxu0 0.0
    %2373 = vmatprep.subr.mxu0 0.0
    %2374 = vmatpush1.msra.mxu0 0.0
    %2375 = vmatprep.subr.mxu0 0.0
    %2376 = vmatpush1.msra.mxu0 0.0
    %2377 = vmatprep.mubr.f32.mxu0 0.0
    %2378 = vmatmul.mubr.f32.gmra.mrb[0].mxu0 %v2308
    %v2379 = vpop.f32.mrb[0].mxu0
    %v2380 = vadd.f32 0.0, %v2379
    %v2381 = vpop.f32.mrb[0].mxu0
    %2382 = vmatprep.mubr.f32.mxu0 0.0
    %2383 = vmatmul.mubr.f32.gmra.mrb[0].mxu0 %v2311
    %v2384 = vpop.f32.mrb[0].mxu0
    %v2385 = vadd.f32 0.0, %v2384
    %v2386 = vpop.f32.mrb[0].mxu0
    %2387 = vdwg.mxu0
    %v2389 = vsel %vm474, %v1993, 0
    %v2392 = vsel %vm474, %v2096, 0
    %2394 = vmatprep.subr.mxu0 0.0
    %2395 = vmatpush1.msra.mxu0 %v2097
    %2396 = vmatprep.subr.mxu0 0.0
    %2397 = vmatpush1.msra.mxu0 0.0
    %2398 = vmatprep.subr.mxu0 0.0
    %2399 = vmatpush1.msra.mxu0 0.0
    %2400 = vmatprep.subr.mxu0 0.0
    %2401 = vmatpush1.msra.mxu0 0.0
    %2402 = vmatprep.subr.mxu0 0.0
    %2403 = vmatpush1.msra.mxu0 0.0
    %2404 = vmatprep.subr.mxu0 0.0
    %2405 = vmatpush1.msra.mxu0 0.0
    %2406 = vmatprep.subr.mxu0 0.0
    %2407 = vmatpush1.msra.mxu0 0.0
    %2408 = vmatprep.subr.mxu0 0.0
    %2409 = vmatpush1.msra.mxu0 0.0
    %2410 = vmatprep.subr.mxu0 0.0
    %2411 = vmatpush1.msra.mxu0 0.0
    %2412 = vmatprep.subr.mxu0 0.0
    %2413 = vmatpush1.msra.mxu0 0.0
    %2414 = vmatprep.subr.mxu0 0.0
    %2415 = vmatpush1.msra.mxu0 0.0
    %2416 = vmatprep.subr.mxu0 0.0
    %2417 = vmatpush1.msra.mxu0 0.0
    %2418 = vmatprep.subr.mxu0 0.0
    %2419 = vmatpush1.msra.mxu0 0.0
    %2420 = vmatprep.subr.mxu0 0.0
    %2421 = vmatpush1.msra.mxu0 0.0
    %2422 = vmatprep.subr.mxu0 0.0
    %2423 = vmatpush1.msra.mxu0 0.0
    %2424 = vmatprep.subr.mxu0 0.0
    %2425 = vmatpush1.msra.mxu0 0.0
    %2426 = vmatprep.subr.mxu0 0.0
    %2427 = vmatpush1.msra.mxu0 0.0
    %2428 = vmatprep.subr.mxu0 0.0
    %2429 = vmatpush1.msra.mxu0 0.0
    %2430 = vmatprep.subr.mxu0 0.0
    %2431 = vmatpush1.msra.mxu0 0.0
    %2432 = vmatprep.subr.mxu0 0.0
    %2433 = vmatpush1.msra.mxu0 0.0
    %2434 = vmatprep.subr.mxu0 0.0
    %2435 = vmatpush1.msra.mxu0 0.0
    %2436 = vmatprep.subr.mxu0 0.0
    %2437 = vmatpush1.msra.mxu0 0.0
    %2438 = vmatprep.subr.mxu0 0.0
    %2439 = vmatpush1.msra.mxu0 0.0
    %2440 = vmatprep.subr.mxu0 0.0
    %2441 = vmatpush1.msra.mxu0 0.0
    %2442 = vmatprep.subr.mxu0 0.0
    %2443 = vmatpush1.msra.mxu0 0.0
    %2444 = vmatprep.subr.mxu0 0.0
    %2445 = vmatpush1.msra.mxu0 0.0
    %2446 = vmatprep.subr.mxu0 0.0
    %2447 = vmatpush1.msra.mxu0 0.0
    %2448 = vmatprep.subr.mxu0 0.0
    %2449 = vmatpush1.msra.mxu0 0.0
    %2450 = vmatprep.subr.mxu0 0.0
    %2451 = vmatpush1.msra.mxu0 0.0
    %2452 = vmatprep.subr.mxu0 0.0
    %2453 = vmatpush1.msra.mxu0 0.0
    %2454 = vmatprep.subr.mxu0 0.0
    %2455 = vmatpush1.msra.mxu0 0.0
    %2456 = vmatprep.subr.mxu0 0.0
    %2457 = vmatpush1.msra.mxu0 0.0
    %2458 = vmatprep.mubr.f32.mxu0 0.0
    %2459 = vmatmul.mubr.f32.gmra.mrb[0].mxu0 %v2389
    %v2460 = vpop.f32.mrb[0].mxu0
    %v2461 = vadd.f32 %v2380, %v2460
    %v2462 = vpop.f32.mrb[0].mxu0
    %2463 = vmatprep.mubr.f32.mxu0 0.0
    %2464 = vmatmul.mubr.f32.gmra.mrb[0].mxu0 %v2392
    %v2465 = vpop.f32.mrb[0].mxu0
    %v2466 = vadd.f32 %v2385, %v2465
    %v2467 = vpop.f32.mrb[0].mxu0
    %2468 = vdwg.mxu0
    %v2469 = vadd.f32 %v2461, %v641
    %v2470 = vadd.f32 %v2466, %v641
    %v2471 = vmax.f32 %v2469, 0.0
    %v2472 = vmax.f32 %v2470, 0.0
    %v2473 = vpack.c.bf16 %v2472, %v2471
    %2475 = vrot.lane.b32.xlu0 %v2473, 48
    %v2476 = vpop.permute.xlu0 %2475
    %vm2478 = vcmask 523648
    %2479 = vst.msk [vmem:[#allocation2] sm:$0xff] %vm2478, %v2476
    %v2480 = vld [vmem:[#allocation2] sm:$0xff]
    %v2481 = vld [vmem:[%s6] sm:$0xf]
    %v2482 = vld [vmem:[%s6 + $0x4] sm:$0xf]
    %v2483 = vld [vmem:[%s6 + $0x8] sm:$0xf]
    %v2484 = vld [vmem:[%s6 + $0xc] sm:$0xf]
    %v2485 = vld [vmem:[%s6 + $0x10] sm:$0xf]
    %v2486 = vld [vmem:[%s6 + $0x14] sm:$0xf]
    %v2487 = vld [vmem:[%s6 + $0x18] sm:$0xf]
    %v2488 = vld [vmem:[%s6 + $0x1c] sm:$0xf]
    %v2489 = vld [vmem:[%s1] sm:$0xf]
    %v2490 = vld [vmem:[%s1 + $0x4] sm:$0xf]
    %v2491 = vld [vmem:[%s7] sm:$0x3]
    %v2494 = vunpack.c.l.b16 %v2489
    %v2495 = vunpack.c.l.b16 %v2490
    %v2496 = vpack.c.b16 %v2495, %v2494
    %vm2497 = vcmask 31744
    %v2499 = vsel %vm2497, %v2496, 0
    %vm2501 = vcmask 1041408
    %v2503 = vsel %vm2501, %v2491, 0
    %2505 = vmatprep.subr.bf16.mxu0 0
    %2506 = vmatpush1.bf16.msra.mxu0 %v2503
    %2507 = vmatprep.subr.bf16.mxu0 0
    %2508 = vmatpush1.bf16.msra.mxu0 0
    %2509 = vmatprep.subr.bf16.mxu0 0
    %2510 = vmatpush1.bf16.msra.mxu0 0
    %2511 = vmatprep.subr.bf16.mxu0 0
    %2512 = vmatpush1.bf16.msra.mxu0 0
    %2513 = vmatprep.subr.bf16.mxu0 0
    %2514 = vmatpush1.bf16.msra.mxu0 0
    %2515 = vmatprep.subr.bf16.mxu0 0
    %2516 = vmatpush1.bf16.msra.mxu0 0
    %2517 = vmatprep.subr.bf16.mxu0 0
    %2518 = vmatpush1.bf16.msra.mxu0 0
    %2519 = vmatprep.subr.bf16.mxu0 0
    %2520 = vmatpush1.bf16.msra.mxu0 0
    %2521 = vmatprep.subr.bf16.mxu0 0
    %2522 = vmatpush1.bf16.msra.mxu0 0
    %2523 = vmatprep.subr.bf16.mxu0 0
    %2524 = vmatpush1.bf16.msra.mxu0 0
    %2525 = vmatprep.subr.bf16.mxu0 0
    %2526 = vmatpush1.bf16.msra.mxu0 0
    %2527 = vmatprep.subr.bf16.mxu0 0
    %2528 = vmatpush1.bf16.msra.mxu0 0
    %2529 = vmatprep.subr.bf16.mxu0 0
    %2530 = vmatpush1.bf16.msra.mxu0 0
    %2531 = vmatprep.subr.bf16.mxu0 0
    %2532 = vmatpush1.bf16.msra.mxu0 0
    %2533 = vmatprep.subr.bf16.mxu0 0
    %2534 = vmatpush1.bf16.msra.mxu0 0
    %2535 = vmatprep.subr.bf16.mxu0 0
    %2536 = vmatpush1.bf16.msra.mxu0 0
    %2537 = vmatprep.mubr.bf16.mxu0 0
    %2538 = vmatmul.mubr.bf16.gmra.mrb[0].mxu0 %v2499
    %v2539 = vpop.f32.mrb[0].mxu0
    %v2540 = vadd.f32 0.0, %v2539
    %v2541 = vpop.f32.mrb[0].mxu0
    %v2542 = vpop.f32.mrb[0].mxu0
    %v2543 = vadd.f32 0.0, %v2542
    %v2544 = vpop.f32.mrb[0].mxu0
    %2545 = vdwg.mxu0
    %v2554 = vunpack.c.l.b16 %v2481
    %v2555 = vunpack.c.l.b16 %v2482
    %v2556 = vunpack.c.l.b16 %v2483
    %v2557 = vunpack.c.l.b16 %v2484
    %v2558 = vunpack.c.l.b16 %v2485
    %v2559 = vunpack.c.l.b16 %v2486
    %v2560 = vunpack.c.l.b16 %v2487
    %v2561 = vunpack.c.l.b16 %v2488
    %v2562 = vpack.c.b16 %v2555, %v2554
    %v2563 = vpack.c.b16 %v2557, %v2556
    %v2564 = vpack.c.b16 %v2559, %v2558
    %v2565 = vpack.c.b16 %v2561, %v2560
    %vm2570 = vcmask 523264
    %v2572 = vsel %vm2570, %v2480, 0
    %2574 = vmatprep.subr.bf16.mxu0 0
    %2575 = vmatpush1.bf16.msra.mxu0 %v2562
    %2576 = vmatprep.subr.bf16.mxu0 0
    %2577 = vmatpush1.bf16.msra.mxu0 %v2563
    %2578 = vmatprep.subr.bf16.mxu0 0
    %2579 = vmatpush1.bf16.msra.mxu0 %v2564
    %2580 = vmatprep.subr.bf16.mxu0 0
    %2581 = vmatpush1.bf16.msra.mxu0 %v2565
    %2582 = vmatprep.subr.bf16.mxu0 0
    %2583 = vmatpush1.bf16.msra.mxu0 0
    %2584 = vmatprep.subr.bf16.mxu0 0
    %2585 = vmatpush1.bf16.msra.mxu0 0
    %2586 = vmatprep.subr.bf16.mxu0 0
    %2587 = vmatpush1.bf16.msra.mxu0 0
    %2588 = vmatprep.subr.bf16.mxu0 0
    %2589 = vmatpush1.bf16.msra.mxu0 0
    %2590 = vmatprep.subr.bf16.mxu0 0
    %2591 = vmatpush1.bf16.msra.mxu0 0
    %2592 = vmatprep.subr.bf16.mxu0 0
    %2593 = vmatpush1.bf16.msra.mxu0 0
    %2594 = vmatprep.subr.bf16.mxu0 0
    %2595 = vmatpush1.bf16.msra.mxu0 0
    %2596 = vmatprep.subr.bf16.mxu0 0
    %2597 = vmatpush1.bf16.msra.mxu0 0
    %2598 = vmatprep.subr.bf16.mxu0 0
    %2599 = vmatpush1.bf16.msra.mxu0 0
    %2600 = vmatprep.subr.bf16.mxu0 0
    %2601 = vmatpush1.bf16.msra.mxu0 0
    %2602 = vmatprep.subr.bf16.mxu0 0
    %2603 = vmatpush1.bf16.msra.mxu0 0
    %2604 = vmatprep.subr.bf16.mxu0 0
    %2605 = vmatpush1.bf16.msra.mxu0 0
    %2606 = vmatprep.mubr.bf16.mxu0 0
    %2607 = vmatmul.mubr.bf16.gmra.mrb[0].mxu0 %v2572
    %v2608 = vpop.f32.mrb[0].mxu0
    %v2609 = vadd.f32 %v2540, %v2608
    %v2610 = vpop.f32.mrb[0].mxu0
    %v2611 = vpop.f32.mrb[0].mxu0
    %v2612 = vadd.f32 %v2543, %v2611
    %v2613 = vpop.f32.mrb[0].mxu0
    %2614 = vdwg.mxu0
    %v2615 = vld [vmem:[%s8] sm:$0x1]
    %v2617 = vlaneseq
    %v2618 = vshrl.u32 %v2617, 7
    %v2619 = vsub.s32 0, %v2618
    %v2620 = vrot.slane %v2615, %v2619
    %v2622 = vadd.f32 %v2609, %v2620
    %v2623 = vadd.f32 %v2612, %v2620
    %v2624 = vpack.c.bf16 %v2623, %v2622
    %v2626 = vunpack.c.l.b16 %v2624
    %v2627 = vunpack.c.h.b16 %v2624
    %v2628 = vpack.c.b16 %v2626, %v2626
    %v2629 = vpack.c.b16 %v2627, %v2627
    %vm2632 = vcmask 257024
    %2633 = vst.msk [vmem:[#allocation3] sm:$0xf] %vm2632, %v2628
    %2634 = vst.msk [vmem:[#allocation3 + $0x4] sm:$0xf] %vm2632, %v2629
    %v2635 = vunpack.c.l.bf16 %v2624
    %v2636 = vunpack.c.h.bf16 %v2624
    %v2637 = vmul.f32 %v2635, %v2635
    %v2638 = vmul.f32 %v2636, %v2636
    %vm2639 = vcmask 261120
    %v2640 = vsel %vm2639, %v2637, 0.0
    %2641 = vadd.xlane.f32.xlu0 %v2640
    %v2642 = vpop.xlane.xlu0 %2641
    %v2643 = vsel %vm2639, %v2638, 0.0
    %2644 = vadd.xlane.f32.xlu0 %v2643
    %v2645 = vpop.xlane.xlu0 %2644
    %vm2646 = vcmask 7168
    %2647 = vst.msk [vmem:[%s10] sm:$0xff] %vm2646, %v2642
    %2648 = vst.msk [vmem:[%s10 + $0x8] sm:$0xff] %vm2646, %v2645
    // Predicated region
    $region38: #{tpu_custom_call.1} parent=1 // pred_check
      _
    $region39: #{tpu_custom_call.1} parent=1 // pred_check_branch
      %2650 = sbr.rel (0) target = $region41
    $region40: #{tpu_custom_call.1} parent=1 // pred_region
      %s2652 = ssub.s32 128, 128
      %2653 = vsyncadd [#allocation4], %s2652
      %s2654 = sshll.u32 [#allocation3], 4
      %s2655 = int_to_ptr.vmem [resolvable:$true] %s2654
      %2660 = dma.vmem_to_hbm [thread:$0]  %s2655, 128, %s9, [#allocation4], 64, 64, 4
    $region41: #{tpu_custom_call.1} parent=1 // pred_fallthru
      _
    // Predicated region
    $region42: #{tpu_custom_call.1} parent=1 // pred_check
      _
    $region43: #{tpu_custom_call.1} parent=1 // pred_check_branch
      %2662 = sbr.rel (0) target = $region45
    $region44: #{tpu_custom_call.1} parent=1 // pred_region
      _
    $region45: #{tpu_custom_call.1} parent=1 // pred_fallthru
      _
    // Predicated region
    $region46: #{tpu_custom_call.1} parent=1 // pred_check
      _
    $region47: #{tpu_custom_call.1} parent=1 // pred_check_branch
      %2664 = sbr.rel (0) target = $region49
    $region48: #{tpu_custom_call.1} parent=1 // pred_region
      %2665 = dma.done [#allocation4], 128
    $region49: #{tpu_custom_call.1} parent=1 // pred_fallthru
      _
    // Predicated region
    $region50: #{tpu_custom_call.1} parent=1 // pred_check
      _
    $region51: #{tpu_custom_call.1} parent=1 // pred_check_branch
      %2667 = sbr.rel (0) target = $region53
    $region52: #{tpu_custom_call.1} parent=1 // pred_region
      _
    $region53: #{tpu_custom_call.1} parent=1 // pred_fallthru
      _
    %2668 = vsyncpa [#allocation4], 1

</llo_original>
